<compile_context>
chip_gen: v5e
topology: v5e:2x2
jax: 0.10.0
libtpu: 0.0.40
codegen_flags: <defaults>
</compile_context>

<pallas_src>
import jax
import jax.numpy as jnp
from jax.experimental import pallas as pl
from jax.experimental.pallas import tpu as pltpu

LEAKY_SLOPE = 0.01
LANE = 128


def _round_up(a, b):
    return (a + b - 1) // b * b


# ---------------------------------------------------------------------------
# Fused Pallas kernel: all GCN layers + mean-pool + fc, row-tiled over adj.
# ---------------------------------------------------------------------------
def make_gcn_kernel(num_layers, num_tiles, tile_rows):
    def kernel(adj_ref, h0_ref, w_ref, b_ref, pool_ref, invcnt_ref,
               wfc_ref, bfc_ref, o_ref, h_buf, hw_buf):
        l = pl.program_id(0)          # layer axis (outer, "arbitrary")
        i = pl.program_id(1)          # adj row-tile axis (inner, pipelined)

        # ---- once per layer: materialize hw = H_{l-1} @ W_l (bf16) ---------
        @pl.when(i == 0)
        def _():
            @pl.when(l == 0)
            def _():
                # X @ W1 was hoisted out of the kernel; H0 already carries W1.
                hw_buf[...] = h0_ref[...]

            @pl.when(l > 0)
            def _():
                prev = h_buf[...].astype(jnp.bfloat16)            # [N_pad, C_pad]
                hw_buf[...] = jnp.dot(
                    prev, w_ref[0],
                    preferred_element_type=jnp.float32).astype(jnp.bfloat16)

        # ---- row tile: z = adj_tile @ hw + b ; leaky_relu ; store ----------
        z = jnp.dot(adj_ref[...], hw_buf[...],
                    preferred_element_type=jnp.float32)            # [TM, C_pad] f32
        z = z + b_ref[0]                                           # bias (f32, VPU)
        z = jnp.where(z > 0, z, jnp.float32(LEAKY_SLOPE) * z)      # leaky_relu (f32)
        row0 = pl.multiple_of(i * tile_rows, tile_rows)
        h_buf[pl.ds(row0, tile_rows), :] = z

        # ---- epilogue on the final (layer, tile): mean pool + fc -----------
        @pl.when(jnp.logical_and(l == num_layers - 1, i == num_tiles - 1))
        def _():
            h_last = h_buf[...].astype(jnp.bfloat16)               # [N_pad, C_pad]
            # 0/1 indicator sum-pool on the MXU (exact in bf16); mean via f32 scale.
            summed = jnp.dot(pool_ref[...], h_last,
                             preferred_element_type=jnp.float32)   # [G_pad, C_pad]
            pooled = summed * invcnt_ref[...]
            # Width-1 Linear as VPU multiply + lane reduce (no width-1 MXU matmul).
            o_ref[...] = (jnp.sum(pooled * wfc_ref[...], axis=-1, keepdims=True)
                          + bfc_ref[...])

    return kernel


# ---------------------------------------------------------------------------
# Generation-aware VMEM budget.
# ---------------------------------------------------------------------------
def _vmem_capacity_bytes():
    default = 128 * 1024 * 1024
    try:
        info = pltpu.get_tpu_info()
    except Exception:
        return default
    for attr in ("vmem_capacity_bytes", "vmem_bytes", "vmem_size_bytes"):
        val = getattr(info, attr, None)
        if val:
            return int(val)
    return default


def _vmem_limit_bytes(tile_rows, n_pad, c_pad, g_pad):
    bf16, f32 = 2, 4
    per_step_inputs = (tile_rows * n_pad * bf16            # adj row tile
                       + n_pad * c_pad * bf16              # H0 (resident)
                       + c_pad * c_pad * bf16              # W_l block
                       + c_pad * f32                       # b_l block
                       + g_pad * n_pad * bf16              # pool indicator
                       + (g_pad + c_pad + 1) * f32)        # invcnt, wfc, bfc
    outputs = g_pad * f32
    scratch = n_pad * c_pad * (f32 + bf16)                 # h_buf + hw_buf
    interm = (3 * tile_rows * c_pad * f32                  # z temporaries
              + 2 * n_pad * c_pad * f32)                   # H@W intermediates / casts
    need = 2 * (per_step_inputs + outputs) + scratch + interm + (8 << 20)
    cap = int(0.8 * _vmem_capacity_bytes())                # ~51 MiB v7x, ~102 MiB v5e/v6e
    return max(32 << 20, min(cap, need))


# ---------------------------------------------------------------------------
# Graph preprocessing (XLA glue outside the kernel).
# TODO(synk): the irregular edge_index scatter-add (sparse -> dense adjacency) has no
# clean rectangular-BlockSpec Pallas equivalent; it stays as XLA scatter glue here.
# ---------------------------------------------------------------------------
def build_norm_adj(edge_index, num_nodes):
    """Dense GCN-normalized adjacency with self loops: D^{-1/2}(A+I)D^{-1/2}, f32."""
    src = edge_index[0].astype(jnp.int32)
    dst = edge_index[1].astype(jnp.int32)
    loops = jnp.arange(num_nodes, dtype=jnp.int32)
    src = jnp.concatenate([src, loops])
    dst = jnp.concatenate([dst, loops])
    a = jnp.zeros((num_nodes, num_nodes), jnp.float32).at[dst, src].add(1.0)
    deg = a.sum(axis=1)
    dinv = jnp.where(deg > 0, 1.0 / jnp.sqrt(deg), 0.0)
    return dinv[:, None] * a * dinv[None, :]


# ---------------------------------------------------------------------------
# Forward pass wrapper (fused pallas_call).
# ---------------------------------------------------------------------------
def gcn_forward(params, x, edge_index, batch, num_graphs, tile_rows=256):
    x = x.astype(jnp.float32)
    n = x.shape[0]
    convs = params["convs"]
    num_layers = len(convs)
    assert tile_rows % 8 == 0, "row tile must respect the (8,128) sublane constraint"

    out_dims = [w.shape[1] for (w, _) in convs]
    c_pad = _round_up(max(out_dims), LANE)                 # lane-dense channel width
    n_pad = _round_up(max(n, tile_rows), tile_rows)
    num_tiles = n_pad // tile_rows
    g_pad = _round_up(max(num_graphs, 8), 8)

    # Normalized adjacency, zero-padded, bf16 (half the HBM bytes of the N^2 operand).
    adj = build_norm_adj(edge_index, n)
    adj_p = jnp.zeros((n_pad, n_pad), jnp.float32).at[:n, :n].set(adj).astype(jnp.bfloat16)

    # Hoisted layer-1 X @ W1 (f32 outside, bf16 operand inside the kernel).
    h0 = x @ convs[0][0]
    h0_p = (jnp.zeros((n_pad, c_pad), jnp.float32)
            .at[:n, :h0.shape[1]].set(h0).astype(jnp.bfloat16))

    # Stacked, 128-lane-padded per-layer weights / biases (W of layer 0 is unused).
    w_stack = jnp.zeros((num_layers, c_pad, c_pad), jnp.float32)
    b_stack = jnp.zeros((num_layers, 1, c_pad), jnp.float32)
    for l, (w, b) in enumerate(convs):
        if l > 0:
            w_stack = w_stack.at[l, :w.shape[0], :w.shape[1]].set(w)
        b_stack = b_stack.at[l, :, :b.shape[1]].set(b)
    w_stack = w_stack.astype(jnp.bfloat16)

    # 0/1 sum-pool indicator (exact in bf16) + f32 reciprocal counts for the mean.
    onehot = (batch[None, :] == jnp.arange(num_graphs)[:, None]).astype(jnp.float32)
    counts = jnp.maximum(onehot.sum(axis=1, keepdims=True), 1.0)
    pool_p = (jnp.zeros((g_pad, n_pad), jnp.float32)
              .at[:num_graphs, :n].set(onehot).astype(jnp.bfloat16))
    invcnt = jnp.zeros((g_pad, 1), jnp.float32).at[:num_graphs].set(1.0 / counts)

    wfc_row = (jnp.zeros((1, c_pad), jnp.float32)
               .at[:, :params["w_fc"].shape[0]].set(params["w_fc"].T))
    bfc = params["b_fc"].astype(jnp.float32)               # (1, 1)

    out_padded = pl.pallas_call(
        make_gcn_kernel(num_layers, num_tiles, tile_rows),
        out_shape=jax.ShapeDtypeStruct((g_pad, 1), jnp.float32),
        grid_spec=pltpu.PrefetchScalarGridSpec(
            num_scalar_prefetch=0,
            grid=(num_layers, num_tiles),
            in_specs=[
                pl.BlockSpec((tile_rows, n_pad), lambda l, i: (i, 0)),    # adj row tile
                pl.BlockSpec((n_pad, c_pad), lambda l, i: (0, 0)),        # H0 (resident)
                pl.BlockSpec((1, c_pad, c_pad), lambda l, i: (l, 0, 0)),  # W_l
                pl.BlockSpec((1, 1, c_pad), lambda l, i: (l, 0, 0)),      # b_l
                pl.BlockSpec((g_pad, n_pad), lambda l, i: (0, 0)),        # pool indicator
                pl.BlockSpec((g_pad, 1), lambda l, i: (0, 0)),            # 1 / counts
                pl.BlockSpec((1, c_pad), lambda l, i: (0, 0)),            # fc weight row
                pl.BlockSpec((1, 1), lambda l, i: (0, 0)),                # fc bias
            ],
            out_specs=pl.BlockSpec((g_pad, 1), lambda l, i: (0, 0)),
            scratch_shapes=[
                pltpu.VMEM((n_pad, c_pad), jnp.float32),    # H, carried across layers
                pltpu.VMEM((n_pad, c_pad), jnp.bfloat16),   # H @ W_l, cached per layer
            ],
        ),
        compiler_params=pltpu.CompilerParams(
            # Row-tile axis is NOT "parallel": H lives in core-private VMEM scratch and
            # is carried across the layer axis, so megacore sharding would break it.
            dimension_semantics=("arbitrary", "arbitrary"),
            vmem_limit_bytes=_vmem_limit_bytes(tile_rows, n_pad, c_pad, g_pad),
        ),
    )(adj_p, h0_p, w_stack, b_stack, pool_p, invcnt, wfc_row, bfc)

    return out_padded[:num_graphs]


# ---------------------------------------------------------------------------
# Pure-JAX f32 reference of the PyTorch forward (for validation).
# ---------------------------------------------------------------------------
def gcn_reference(params, x, edge_index, batch, num_graphs):
    x = x.astype(jnp.float32)
    adj = build_norm_adj(edge_index, x.shape[0])
    h = x
    for (w, b) in params["convs"]:
        h = adj @ (h @ w) + b
        h = jnp.where(h > 0, h, LEAKY_SLOPE * h)
    onehot = (batch[None, :] == jnp.arange(num_graphs)[:, None]).astype(jnp.float32)
    counts = jnp.maximum(onehot.sum(axis=1, keepdims=True), 1.0)
    pooled = (onehot @ h) / counts
    return pooled @ params["w_fc"] + params["b_fc"]


# ---------------------------------------------------------------------------
# Deterministic parameter init.
# ---------------------------------------------------------------------------
def init_params(key, in_channels, hidden_channels, out_channels, num_layers=3):
    dims = [in_channels] + [hidden_channels] * (num_layers - 1) + [out_channels]
    params = {"convs": []}
    for i in range(num_layers):
        key, kw = jax.random.split(key)
        fan_in, fan_out = dims[i], dims[i + 1]
        scale = jnp.sqrt(6.0 / (fan_in + fan_out))          # glorot-uniform-ish
        w = jax.random.uniform(kw, (fan_in, fan_out), jnp.float32, -scale, scale)
        b = jnp.zeros((1, fan_out), jnp.float32)
        params["convs"].append((w, b))
    key, kfc = jax.random.split(key)
    fscale = 1.0 / jnp.sqrt(out_channels)
    params["w_fc"] = jax.random.uniform(kfc, (out_channels, 1), jnp.float32, -fscale, fscale)
    params["b_fc"] = jnp.zeros((1, 1), jnp.float32)
    return params


# ---------------------------------------------------------------------------
if __name__ == "__main__":
    in_channels, hidden_channels, out_channels = 4, 32, 8
    num_layers = 3
    num_graphs = 2
    nodes_per_graph = 8
    n = num_graphs * nodes_per_graph            # 16 nodes total

    key = jax.random.PRNGKey(0)
    key, kx = jax.random.split(key)
    x = jax.random.normal(kx, (n, in_channels), jnp.float32)

    # Two ring graphs (both edge directions), node ids offset per graph.
    src_list, dst_list = [], []
    for g in range(num_graphs):
        off = g * nodes_per_graph
        for v in range(nodes_per_graph):
            a = off + v
            b = off + (v + 1) % nodes_per_graph
            src_list += [a, b]
            dst_list += [b, a]
    edge_index = jnp.array([src_list, dst_list], dtype=jnp.int32)
    batch = jnp.repeat(jnp.arange(num_graphs, dtype=jnp.int32), nodes_per_graph)

    params = init_params(key, in_channels, hidden_channels, out_channels, num_layers)
    ref = gcn_reference(params, x, edge_index, batch, num_graphs)

    # Default production tiling (tile_rows=256 -> single row tile at this demo size).
    out = gcn_forward(params, x, edge_index, batch, num_graphs)
    out = jax.block_until_ready(out)
    assert out.shape == (num_graphs, 1)
    assert bool(jnp.all(jnp.isfinite(out)))
    assert bool(jnp.allclose(out, ref, rtol=1e-1, atol=5e-2)), (out, ref)

    # Also exercise the multi-row-tile pipelined path at demo scale (2 tiles of 8 rows).
    out_tiled = gcn_forward(params, x, edge_index, batch, num_graphs, tile_rows=8)
    out_tiled = jax.block_until_ready(out_tiled)
    assert bool(jnp.allclose(out_tiled, ref, rtol=1e-1, atol=5e-2)), (out_tiled, ref)

    print("KERNEL_OK")
</pallas_src>

<mosaic_0001>
module attributes {stable_mosaic.version = 11 : i64} {
  func.func @kernel(%arg0: i32, %arg1: i32, %arg2: memref<256x256xbf16, #tpu.memory_space<vmem>>, %arg3: memref<256x128xbf16, #tpu.memory_space<vmem>>, %arg4: memref<1x128x128xbf16, #tpu.memory_space<vmem>>, %arg5: memref<1x1x128xf32, #tpu.memory_space<vmem>>, %arg6: memref<8x256xbf16, #tpu.memory_space<vmem>>, %arg7: memref<8x1xf32, #tpu.memory_space<vmem>>, %arg8: memref<1x128xf32, #tpu.memory_space<vmem>>, %arg9: memref<1x1xf32, #tpu.memory_space<vmem>>, %arg10: memref<8x1xf32, #tpu.memory_space<vmem>>, %arg11: memref<256x128xf32, #tpu.memory_space<vmem>>, %arg12: memref<256x128xbf16, #tpu.memory_space<vmem>>) attributes {dimension_semantics = [#tpu.dimension_semantics<arbitrary>, #tpu.dimension_semantics<arbitrary>], iteration_bounds = array<i64: 3, 1>, scalar_prefetch = 0 : i64, scratch_operands = 2 : i64, tpu.core_type = #tpu.core_type<tc>, window_params = [{transform_indices = @transform_0, window_bounds = array<i64: 256, 256>}, {pipeline_mode = #tpu.pipeline_mode<synchronous>, transform_indices = @transform_1, window_bounds = array<i64: 256, 128>}, {transform_indices = @transform_2, window_bounds = array<i64: 1, 128, 128>}, {transform_indices = @transform_3, window_bounds = array<i64: 1, 1, 128>}, {pipeline_mode = #tpu.pipeline_mode<synchronous>, transform_indices = @transform_4, window_bounds = array<i64: 8, 256>}, {pipeline_mode = #tpu.pipeline_mode<synchronous>, transform_indices = @transform_5, window_bounds = array<i64: 8, 1>}, {pipeline_mode = #tpu.pipeline_mode<synchronous>, transform_indices = @transform_6, window_bounds = array<i64: 1, 128>}, {pipeline_mode = #tpu.pipeline_mode<synchronous>, transform_indices = @transform_7, window_bounds = array<i64: 1, 1>}, {pipeline_mode = #tpu.pipeline_mode<synchronous>, transform_indices = @transform_8, window_bounds = array<i64: 8, 1>}]} {
    %c0_i32 = arith.constant 0 : i32
    %0 = arith.cmpi eq, %arg1, %c0_i32 : i32
    %1 = arith.extui %0 : i1 to i32
    %c0_i32_0 = arith.constant 0 : i32
    %2 = arith.cmpi ne, %1, %c0_i32_0 : i32
    scf.if %2 {
      %c0_i32_12 = arith.constant 0 : i32
      %24 = arith.cmpi eq, %arg0, %c0_i32_12 : i32
      %25 = arith.extui %24 : i1 to i32
      %c0_i32_13 = arith.constant 0 : i32
      %26 = arith.cmpi ne, %25, %c0_i32_13 : i32
      scf.if %26 {
        %c0_16 = arith.constant 0 : index
        %c0_17 = arith.constant 0 : index
        %30 = vector.load %arg3[%c0_16, %c0_17] : memref<256x128xbf16, #tpu.memory_space<vmem>>, vector<256x128xbf16>
        %c0_18 = arith.constant 0 : index
        %c0_19 = arith.constant 0 : index
        %31 = vector.load %arg12[%c0_18, %c0_19] : memref<256x128xbf16, #tpu.memory_space<vmem>>, vector<256x128xbf16>
        tpu.vector_store %arg12[%c0_18, %c0_19], %30 {strides = array<i32>} : memref<256x128xbf16, #tpu.memory_space<vmem>>, vector<256x128xbf16>,
      } else {
      }
      %c0_i32_14 = arith.constant 0 : i32
      %27 = arith.cmpi sgt, %arg0, %c0_i32_14 : i32
      %28 = arith.extui %27 : i1 to i32
      %c0_i32_15 = arith.constant 0 : i32
      %29 = arith.cmpi ne, %28, %c0_i32_15 : i32
      scf.if %29 {
        %c0_16 = arith.constant 0 : index
        %c0_17 = arith.constant 0 : index
        %30 = vector.load %arg11[%c0_16, %c0_17] : memref<256x128xf32, #tpu.memory_space<vmem>>, vector<256x128xf32>
        %31 = arith.truncf %30 : vector<256x128xf32> to vector<256x128xbf16>
        %c0_18 = arith.constant 0 : index
        %c0_19 = arith.constant 0 : index
        %c0_20 = arith.constant 0 : index
        %32 = vector.load %arg4[%c0_18, %c0_19, %c0_20] : memref<1x128x128xbf16, #tpu.memory_space<vmem>>, vector<1x128x128xbf16>
        %33 = vector.shape_cast %32 : vector<1x128x128xbf16> to vector<128x128xbf16>
        %cst_21 = arith.constant dense<0.000000e+00> : vector<256x128xf32>
        %34 = tpu.matmul %31, %33, %cst_21 {dimension_numbers = #tpu.dot_dimension_numbers<[1], [0], [0], [1], [0, 0, 1, 1], [], []>} : vector<256x128xbf16>, vector<128x128xbf16>, vector<256x128xf32> -> vector<256x128xf32>
        %35 = arith.truncf %34 : vector<256x128xf32> to vector<256x128xbf16>
        %c0_22 = arith.constant 0 : index
        %c0_23 = arith.constant 0 : index
        %36 = vector.load %arg12[%c0_22, %c0_23] : memref<256x128xbf16, #tpu.memory_space<vmem>>, vector<256x128xbf16>
        tpu.vector_store %arg12[%c0_22, %c0_23], %35 {strides = array<i32>} : memref<256x128xbf16, #tpu.memory_space<vmem>>, vector<256x128xbf16>,
      } else {
      }
    } else {
    }
    %c0 = arith.constant 0 : index
    %c0_1 = arith.constant 0 : index
    %3 = vector.load %arg2[%c0, %c0_1] : memref<256x256xbf16, #tpu.memory_space<vmem>>, vector<256x256xbf16>
    %c0_2 = arith.constant 0 : index
    %c0_3 = arith.constant 0 : index
    %4 = vector.load %arg12[%c0_2, %c0_3] : memref<256x128xbf16, #tpu.memory_space<vmem>>, vector<256x128xbf16>
    %cst = arith.constant dense<0.000000e+00> : vector<256x128xf32>
    %5 = tpu.matmul %3, %4, %cst {dimension_numbers = #tpu.dot_dimension_numbers<[1], [0], [0], [1], [0, 0, 1, 1], [], []>} : vector<256x256xbf16>, vector<256x128xbf16>, vector<256x128xf32> -> vector<256x128xf32>
    %c0_4 = arith.constant 0 : index
    %c0_5 = arith.constant 0 : index
    %c0_6 = arith.constant 0 : index
    %6 = vector.load %arg5[%c0_4, %c0_5, %c0_6] : memref<1x1x128xf32, #tpu.memory_space<vmem>>, vector<1x1x128xf32>
    %7 = vector.shape_cast %6 : vector<1x1x128xf32> to vector<1x128xf32>
    %8 = vector.broadcast %7 : vector<1x128xf32> to vector<256x128xf32>
    %9 = arith.addf %5, %8 : vector<256x128xf32>
    %cst_7 = arith.constant 0.000000e+00 : f32
    %10 = vector.broadcast %cst_7 : f32 to vector<256x128xf32>
    %11 = arith.cmpf ogt, %9, %10 : vector<256x128xf32>
    %cst_8 = arith.constant 0.00999999977 : f32
    %12 = vector.broadcast %cst_8 : f32 to vector<256x128xf32>
    %13 = arith.mulf %12, %9 : vector<256x128xf32>
    %14 = arith.select %11, %9, %13 : vector<256x128xi1>, vector<256x128xf32>
    %c256_i32 = arith.constant 256 : i32
    %15 = arith.muli %arg1, %c256_i32 : i32
    %16 = tpu.assume_multiple %15, 256 : i32
    %17 = arith.index_cast %16 : i32 to index
    %c0_9 = arith.constant 0 : index
    %18 = vector.load %arg11[%17, %c0_9] : memref<256x128xf32, #tpu.memory_space<vmem>>, vector<256x128xf32>
    tpu.vector_store %arg11[%17, %c0_9], %14 {strides = array<i32>} : memref<256x128xf32, #tpu.memory_space<vmem>>, vector<256x128xf32>,
    %c2_i32 = arith.constant 2 : i32
    %19 = arith.cmpi eq, %arg0, %c2_i32 : i32
    %c0_i32_10 = arith.constant 0 : i32
    %20 = arith.cmpi eq, %arg1, %c0_i32_10 : i32
    %21 = arith.andi %19, %20 : i1
    %22 = arith.extui %21 : i1 to i32
    %c0_i32_11 = arith.constant 0 : i32
    %23 = arith.cmpi ne, %22, %c0_i32_11 : i32
    scf.if %23 {
      %c0_12 = arith.constant 0 : index
      %c0_13 = arith.constant 0 : index
      %24 = vector.load %arg11[%c0_12, %c0_13] : memref<256x128xf32, #tpu.memory_space<vmem>>, vector<256x128xf32>
      %25 = arith.truncf %24 : vector<256x128xf32> to vector<256x128xbf16>
      %c0_14 = arith.constant 0 : index
      %c0_15 = arith.constant 0 : index
      %26 = vector.load %arg6[%c0_14, %c0_15] : memref<8x256xbf16, #tpu.memory_space<vmem>>, vector<8x256xbf16>
      %cst_16 = arith.constant dense<0.000000e+00> : vector<8x128xf32>
      %27 = tpu.matmul %26, %25, %cst_16 {dimension_numbers = #tpu.dot_dimension_numbers<[1], [0], [0], [1], [0, 0, 1, 1], [], []>} : vector<8x256xbf16>, vector<256x128xbf16>, vector<8x128xf32> -> vector<8x128xf32>
      %c0_17 = arith.constant 0 : index
      %c0_18 = arith.constant 0 : index
      %28 = vector.load %arg7[%c0_17, %c0_18] : memref<8x1xf32, #tpu.memory_space<vmem>>, vector<8x1xf32>
      %29 = vector.broadcast %28 : vector<8x1xf32> to vector<8x128xf32>
      %30 = arith.mulf %27, %29 : vector<8x128xf32>
      %c0_19 = arith.constant 0 : index
      %c0_20 = arith.constant 0 : index
      %31 = vector.load %arg8[%c0_19, %c0_20] : memref<1x128xf32, #tpu.memory_space<vmem>>, vector<1x128xf32>
      %32 = vector.broadcast %31 : vector<1x128xf32> to vector<8x128xf32>
      %33 = arith.mulf %30, %32 : vector<8x128xf32>
      %cst_21 = arith.constant dense<0.000000e+00> : vector<8xf32>
      %34 = vector.multi_reduction <add>, %33, %cst_21 [1] : vector<8x128xf32> to vector<8xf32>
      %35 = vector.shape_cast %34 : vector<8xf32> to vector<8x1xf32>
      %c0_22 = arith.constant 0 : index
      %c0_23 = arith.constant 0 : index
      %36 = vector.load %arg9[%c0_22, %c0_23] : memref<1x1xf32, #tpu.memory_space<vmem>>, vector<1x1xf32>
      %37 = vector.broadcast %36 : vector<1x1xf32> to vector<8x1xf32>
      %38 = arith.addf %35, %37 : vector<8x1xf32>
      %c0_24 = arith.constant 0 : index
      %c0_25 = arith.constant 0 : index
      %39 = vector.load %arg10[%c0_24, %c0_25] : memref<8x1xf32, #tpu.memory_space<vmem>>, vector<8x1xf32>
      tpu.vector_store %arg10[%c0_24, %c0_25], %38 {strides = array<i32>} : memref<8x1xf32, #tpu.memory_space<vmem>>, vector<8x1xf32>,
    } else {
    }
    return
  }
  func.func @transform_0(%arg0: i32, %arg1: i32) -> (i32, i32) {
    %c0_i32 = arith.constant 0 : i32
    %c0_i32_0 = arith.constant 0 : i32
    return %arg1, %c0_i32 : i32, i32
  }
  func.func @transform_1(%arg0: i32, %arg1: i32) -> (i32, i32) {
    %c0_i32 = arith.constant 0 : i32
    %c0_i32_0 = arith.constant 0 : i32
    %c0_i32_1 = arith.constant 0 : i32
    return %c0_i32, %c0_i32_0 : i32, i32
  }
  func.func @transform_2(%arg0: i32, %arg1: i32) -> (i32, i32, i32) {
    %c0_i32 = arith.constant 0 : i32
    %c0_i32_0 = arith.constant 0 : i32
    %c0_i32_1 = arith.constant 0 : i32
    return %arg0, %c0_i32, %c0_i32_0 : i32, i32, i32
  }
  func.func @transform_3(%arg0: i32, %arg1: i32) -> (i32, i32, i32) {
    %c0_i32 = arith.constant 0 : i32
    %c0_i32_0 = arith.constant 0 : i32
    %c0_i32_1 = arith.constant 0 : i32
    return %arg0, %c0_i32, %c0_i32_0 : i32, i32, i32
  }
  func.func @transform_4(%arg0: i32, %arg1: i32) -> (i32, i32) {
    %c0_i32 = arith.constant 0 : i32
    %c0_i32_0 = arith.constant 0 : i32
    %c0_i32_1 = arith.constant 0 : i32
    return %c0_i32, %c0_i32_0 : i32, i32
  }
  func.func @transform_5(%arg0: i32, %arg1: i32) -> (i32, i32) {
    %c0_i32 = arith.constant 0 : i32
    %c0_i32_0 = arith.constant 0 : i32
    %c0_i32_1 = arith.constant 0 : i32
    return %c0_i32, %c0_i32_0 : i32, i32
  }
  func.func @transform_6(%arg0: i32, %arg1: i32) -> (i32, i32) {
    %c0_i32 = arith.constant 0 : i32
    %c0_i32_0 = arith.constant 0 : i32
    %c0_i32_1 = arith.constant 0 : i32
    return %c0_i32, %c0_i32_0 : i32, i32
  }
  func.func @transform_7(%arg0: i32, %arg1: i32) -> (i32, i32) {
    %c0_i32 = arith.constant 0 : i32
    %c0_i32_0 = arith.constant 0 : i32
    %c0_i32_1 = arith.constant 0 : i32
    return %c0_i32, %c0_i32_0 : i32, i32
  }
  func.func @transform_8(%arg0: i32, %arg1: i32) -> (i32, i32) {
    %c0_i32 = arith.constant 0 : i32
    %c0_i32_0 = arith.constant 0 : i32
    %c0_i32_1 = arith.constant 0 : i32
    return %c0_i32, %c0_i32_0 : i32, i32
  }
}

</mosaic_0001>

<llo_original>
// kernel: tpu_custom_call.1
$region0: #{tpu_custom_call.1}
  #allocation0 [shape = 'u32[]', space=smem, size = 0x4, offset = 0x4, fixed_abs, tag = 'smem constant byte address 0x4 - core index']
  #allocation1 [shape = 'u32[72,128]{1,0:T(1,128)}', space=vmem, size = 0x9000, scoped, tag = 'internal scratch']
  #allocation2 [shape = 'f32[256,128]{1,0:T(8,128)}', space=vmem, size = 0x20000, scoped, tag = 'scratch operand']
  #allocation3 [shape = 'bf16[256,128]{1,0:T(8,128)(2,1)}', space=vmem, size = 0x10000, scoped, tag = 'scratch operand']
  #allocation4 [shape = 'f32[1,1]{1,0:T(1,128)S(1)}', space=vmem, size = 0x200, scoped, tag = 'scoped memory for tpu_custom_call.1']
  %s0 = inlined_call_operand.hbm [shape: bf16[256,256], index: 0, kind: input, shape index: {}]
  %s1 = inlined_call_operand.hbm [shape: bf16[256,128], index: 1, kind: input, shape index: {}]
  %s2 = inlined_call_operand.hbm [shape: bf16[3,128,128], index: 2, kind: input, shape index: {}]
  %s3 = inlined_call_operand.vmem [shape: f32[3,1,128], index: 3, kind: input, shape index: {}]
  %s4 = inlined_call_operand.vmem [shape: bf16[8,256], index: 4, kind: input, shape index: {}]
  %s5 = inlined_call_operand.vmem [shape: f32[8,1], index: 5, kind: input, shape index: {}]
  %s6 = inlined_call_operand.vmem [shape: f32[1,128], index: 6, kind: input, shape index: {}]
  %s7 = inlined_call_operand.<no memory space> [shape: f32[1,1], index: 7, kind: input, shape index: {}]
  %s8 = inlined_call_operand.vmem [shape: f32[8,1], index: 8, kind: output, shape index: {}]
  %s9 = sld [smem:[#allocation0]]
  $region93: #{tpu_custom_call.1} parent=0
    _
  %s11 = ssub.s32 1, %s9
  %s12 = scalar_select 0, %s11, %s9
  %v13 = vstv %s7
  %14 = vst [vmem:[#allocation4] sm:$0x1] %v13
  $region1: #{tpu_custom_call.1} parent=0
    #allocation5 [shape = 'u8[131072]{0}', space=vmem, size = 0x20000, scoped, tag = 'input window, operand 0, single buffered']
    #allocation6 [shape = 's32[2]{0}', space=sflag, size = 0x8, scoped, tag = 'scoped memory for tpu_custom_call.1']
    #allocation7 [shape = 'u8[65536]{0}', space=vmem, size = 0x10000, scoped, tag = 'input window, operand 1, single buffered']
    #allocation8 [shape = 's32[1]{0}', space=sflag, size = 0x4, scoped, tag = 'scoped memory for tpu_custom_call.1']
    #allocation9 [shape = 'u8[65536]{0}', space=vmem, size = 0x10000, scoped, tag = 'input window, operand 2']
    %15 = vsyncpa [#allocation6], 0
    %16 = vsyncpa [#allocation8], 0
    loop: start=0, step=1, limit=5
    $region2: #{tpu_custom_call.1} parent=1 // loop_pre_header
      _
    $region3: #{tpu_custom_call.1} parent=1 // loop_header
      %s18 = sphi 0, %s22
      %p19 = scmp.ge.s32.totalorder %s18, 5
      %s25 = sphi 0, %s37
      %s26 = sphi 0, %s33
      %s27 = sphi 0, %s25
      %s28 = sphi 0, %s26
      %s29 = sphi 0, %s27
      %s30 = sphi 0, %s28
      %s40 = sphi 0, %s42
      %s43 = sphi 0, %s40
      %s44 = sphi 0, %s43
      %s60 = sphi 0, %s44
      %s64 = sphi 0, %s64
      %s66 = sphi 0, %s64
      %s67 = sphi 0, %s66
      %s81 = sphi 0, %s67
      %s87 = sphi 0, %s89
      %s90 = sphi 0, %s87
      %s91 = sphi 0, %s90
      %s107 = sphi 0, %s91
      %s113 = sphi 0, %s115
      %s116 = sphi 0, %s113
      %s117 = sphi 0, %s116
      %s133 = sphi 0, %s117
      %s137 = sphi 0, %s137
      %s139 = sphi 0, %s137
      %s140 = sphi 0, %s139
      %s154 = sphi 0, %s140
      %s158 = sphi 0, %s158
      %s160 = sphi 0, %s158
      %s161 = sphi 0, %s160
      %s175 = sphi 0, %s161
      %s179 = sphi 0, %s179
      %s181 = sphi 0, %s179
      %s182 = sphi 0, %s181
      %s196 = sphi 0, %s182
      %s200 = sphi 0, %s200
      %s202 = sphi 0, %s200
      %s203 = sphi 0, %s202
      %s217 = sphi 0, %s203
      %s221 = sphi 0, %s221
      %s223 = sphi 0, %s221
      %s224 = sphi 0, %s223
      %s238 = sphi 0, %s224
    $region4: #{tpu_custom_call.1} parent=1 // loop_header_branch
      %21 = sbr.rel (%p19) target = $region8
    $region5: #{tpu_custom_call.1} parent=1 // loop_body
      %s23 = ssub.s32 %s18, 1
      %s24 = ssub.s32 %s18, 2
      %s31 = sadd.s32 1, %s26
      %p32 = scmp.ge.s32.totalorder %s31, 1
      %s33 = scalar_select %p32, 0, %s31
      %s34 = sadd.s32 1, %s25
      %s35 = scalar_select %p32, %s34, %s25
      %p36 = scmp.ge.s32.totalorder %s35, 3
      %s37 = scalar_select %p36, 0, %s35
      %s38 = ssub.s32 %s26, %s33
      %p39 = scmp.eq.s32.totalorder %s38, 0
      %s41 = sadd.s32 %s40, 1
      %s42 = scalar_select %p39, %s40, %s41
      %p45 = pneg %p39
      %p46 = scmp.eq.s32.totalorder %s18, 2
      %p47 = por %p45, %p46
      %p48 = scmp.ne.s32.totalorder %s40, %s43
      %p49 = scmp.eq.s32.totalorder %s18, 0
      %p50 = por %p48, %p49
      %p51 = scmp.ne.s32.totalorder %s40, %s43
      %p52 = scmp.eq.s32.totalorder %s23, 2
      %p53 = por %p51, %p52
      %p54 = scmp.ne.s32.totalorder %s43, %s44
      %p55 = scmp.eq.s32.totalorder %s23, 0
      %p56 = por %p54, %p55
      %p57 = scmp.ne.s32.totalorder %s43, %s44
      %p58 = scmp.eq.s32.totalorder %s24, 2
      %p59 = por %p57, %p58
      %p61 = scmp.ne.s32.totalorder %s44, %s60
      %p62 = scmp.eq.s32.totalorder %s24, 0
      %p63 = por %p61, %p62
      %s65 = sadd.s32 %s64, 1
      %p68 = scmp.eq.s32.totalorder %s18, 2
      %p69 = scmp.ne.s32.totalorder %s64, %s66
      %p70 = scmp.eq.s32.totalorder %s18, 0
      %p71 = por %p69, %p70
      %p72 = scmp.ne.s32.totalorder %s64, %s66
      %p73 = scmp.eq.s32.totalorder %s23, 2
      %p74 = por %p72, %p73
      %p75 = scmp.ne.s32.totalorder %s66, %s67
      %p76 = scmp.eq.s32.totalorder %s23, 0
      %p77 = por %p75, %p76
      %p78 = scmp.ne.s32.totalorder %s66, %s67
      %p79 = scmp.eq.s32.totalorder %s24, 2
      %p80 = por %p78, %p79
      %p82 = scmp.ne.s32.totalorder %s67, %s81
      %p83 = scmp.eq.s32.totalorder %s24, 0
      %p84 = por %p82, %p83
      %s85 = ssub.s32 %s25, %s37
      %p86 = scmp.eq.s32.totalorder %s85, 0
      %s88 = sadd.s32 %s87, 1
      %s89 = scalar_select %p86, %s87, %s88
      %p92 = pneg %p86
      %p93 = scmp.eq.s32.totalorder %s18, 2
      %p94 = por %p92, %p93
      %p95 = scmp.ne.s32.totalorder %s87, %s90
      %p96 = scmp.eq.s32.totalorder %s18, 0
      %p97 = por %p95, %p96
      %p98 = scmp.ne.s32.totalorder %s87, %s90
      %p99 = scmp.eq.s32.totalorder %s23, 2
      %p100 = por %p98, %p99
      %p101 = scmp.ne.s32.totalorder %s90, %s91
      %p102 = scmp.eq.s32.totalorder %s23, 0
      %p103 = por %p101, %p102
      %p104 = scmp.ne.s32.totalorder %s90, %s91
      %p105 = scmp.eq.s32.totalorder %s24, 2
      %p106 = por %p104, %p105
      %p108 = scmp.ne.s32.totalorder %s91, %s107
      %p109 = scmp.eq.s32.totalorder %s24, 0
      %p110 = por %p108, %p109
      %s111 = ssub.s32 %s25, %s37
      %p112 = scmp.eq.s32.totalorder %s111, 0
      %s114 = sadd.s32 %s113, 1
      %s115 = scalar_select %p112, %s113, %s114
      %p118 = pneg %p112
      %p119 = scmp.eq.s32.totalorder %s18, 2
      %p120 = por %p118, %p119
      %p121 = scmp.ne.s32.totalorder %s113, %s116
      %p122 = scmp.eq.s32.totalorder %s18, 0
      %p123 = por %p121, %p122
      %p124 = scmp.ne.s32.totalorder %s113, %s116
      %p125 = scmp.eq.s32.totalorder %s23, 2
      %p126 = por %p124, %p125
      %p127 = scmp.ne.s32.totalorder %s116, %s117
      %p128 = scmp.eq.s32.totalorder %s23, 0
      %p129 = por %p127, %p128
      %p130 = scmp.ne.s32.totalorder %s116, %s117
      %p131 = scmp.eq.s32.totalorder %s24, 2
      %p132 = por %p130, %p131
      %p134 = scmp.ne.s32.totalorder %s117, %s133
      %p135 = scmp.eq.s32.totalorder %s24, 0
      %p136 = por %p134, %p135
      %s138 = sadd.s32 %s137, 1
      %p141 = scmp.eq.s32.totalorder %s18, 2
      %p142 = scmp.ne.s32.totalorder %s137, %s139
      %p143 = scmp.eq.s32.totalorder %s18, 0
      %p144 = por %p142, %p143
      %p145 = scmp.ne.s32.totalorder %s137, %s139
      %p146 = scmp.eq.s32.totalorder %s23, 2
      %p147 = por %p145, %p146
      %p148 = scmp.ne.s32.totalorder %s139, %s140
      %p149 = scmp.eq.s32.totalorder %s23, 0
      %p150 = por %p148, %p149
      %p151 = scmp.ne.s32.totalorder %s139, %s140
      %p152 = scmp.eq.s32.totalorder %s24, 2
      %p153 = por %p151, %p152
      %p155 = scmp.ne.s32.totalorder %s140, %s154
      %p156 = scmp.eq.s32.totalorder %s24, 0
      %p157 = por %p155, %p156
      %s159 = sadd.s32 %s158, 1
      %p162 = scmp.eq.s32.totalorder %s18, 2
      %p163 = scmp.ne.s32.totalorder %s158, %s160
      %p164 = scmp.eq.s32.totalorder %s18, 0
      %p165 = por %p163, %p164
      %p166 = scmp.ne.s32.totalorder %s158, %s160
      %p167 = scmp.eq.s32.totalorder %s23, 2
      %p168 = por %p166, %p167
      %p169 = scmp.ne.s32.totalorder %s160, %s161
      %p170 = scmp.eq.s32.totalorder %s23, 0
      %p171 = por %p169, %p170
      %p172 = scmp.ne.s32.totalorder %s160, %s161
      %p173 = scmp.eq.s32.totalorder %s24, 2
      %p174 = por %p172, %p173
      %p176 = scmp.ne.s32.totalorder %s161, %s175
      %p177 = scmp.eq.s32.totalorder %s24, 0
      %p178 = por %p176, %p177
      %s180 = sadd.s32 %s179, 1
      %p183 = scmp.eq.s32.totalorder %s18, 2
      %p184 = scmp.ne.s32.totalorder %s179, %s181
      %p185 = scmp.eq.s32.totalorder %s18, 0
      %p186 = por %p184, %p185
      %p187 = scmp.ne.s32.totalorder %s179, %s181
      %p188 = scmp.eq.s32.totalorder %s23, 2
      %p189 = por %p187, %p188
      %p190 = scmp.ne.s32.totalorder %s181, %s182
      %p191 = scmp.eq.s32.totalorder %s23, 0
      %p192 = por %p190, %p191
      %p193 = scmp.ne.s32.totalorder %s181, %s182
      %p194 = scmp.eq.s32.totalorder %s24, 2
      %p195 = por %p193, %p194
      %p197 = scmp.ne.s32.totalorder %s182, %s196
      %p198 = scmp.eq.s32.totalorder %s24, 0
      %p199 = por %p197, %p198
      %s201 = sadd.s32 %s200, 1
      %p204 = scmp.eq.s32.totalorder %s18, 2
      %p205 = scmp.ne.s32.totalorder %s200, %s202
      %p206 = scmp.eq.s32.totalorder %s18, 0
      %p207 = por %p205, %p206
      %p208 = scmp.ne.s32.totalorder %s200, %s202
      %p209 = scmp.eq.s32.totalorder %s23, 2
      %p210 = por %p208, %p209
      %p211 = scmp.ne.s32.totalorder %s202, %s203
      %p212 = scmp.eq.s32.totalorder %s23, 0
      %p213 = por %p211, %p212
      %p214 = scmp.ne.s32.totalorder %s202, %s203
      %p215 = scmp.eq.s32.totalorder %s24, 2
      %p216 = por %p214, %p215
      %p218 = scmp.ne.s32.totalorder %s203, %s217
      %p219 = scmp.eq.s32.totalorder %s24, 0
      %p220 = por %p218, %p219
      %s222 = sadd.s32 %s221, 1
      %p225 = scmp.eq.s32.totalorder %s18, 2
      %p226 = scmp.ne.s32.totalorder %s221, %s223
      %p227 = scmp.eq.s32.totalorder %s18, 0
      %p228 = por %p226, %p227
      %p229 = scmp.ne.s32.totalorder %s221, %s223
      %p230 = scmp.eq.s32.totalorder %s23, 2
      %p231 = por %p229, %p230
      %p232 = scmp.ne.s32.totalorder %s223, %s224
      %p233 = scmp.eq.s32.totalorder %s23, 0
      %p234 = por %p232, %p233
      %p235 = scmp.ne.s32.totalorder %s223, %s224
      %p236 = scmp.eq.s32.totalorder %s24, 2
      %p237 = por %p235, %p236
      %p239 = scmp.ne.s32.totalorder %s224, %s238
      %p240 = scmp.eq.s32.totalorder %s24, 0
      %p241 = por %p239, %p240
      %p242 = scmp.le.s32.totalorder 1, %s18
      %p243 = scmp.lt.s32.totalorder %s18, 4
      %p244 = pnand %p242, %p243
      %p245 = pneg %p244
      // Predicated region
      $region9: #{tpu_custom_call.1} parent=5 // pred_check
        _
      $region10: #{tpu_custom_call.1} parent=5 // pred_check_branch
        %247 = sbr.rel (%p244) target = $region12
      $region11: #{tpu_custom_call.1} parent=5 // pred_region
        %s248 = ssub.s32 %s18, 1
        // Predicated region
        $region13: #{tpu_custom_call.1} parent=11 // pred_check
          %p249 = pneg %p56
        $region14: #{tpu_custom_call.1} parent=11 // pred_check_branch
          %251 = sbr.rel (%p249) target = $region16
        $region15: #{tpu_custom_call.1} parent=11 // pred_region
          %s252 = smul.u32 32, %s28
          %254 = vsyncadd [#allocation6], 0
          %s255 = smul.addr %s252, 2
          %s256 = smul.addr %s255, 4
          %s257 = scalar_lea.hbm %s0, %s256
          %s258 = sshll.u32 %s257, 4
          %s259 = int_to_ptr.hbm [resolvable:$true] %s258
          %s260 = sshll.u32 [#allocation5], 4
          %s261 = int_to_ptr.vmem [resolvable:$true] %s260
          %266 = dma.hbm_to_vmem [thread:$0]  %s259, 4096, %s261, [#allocation6], 128, 128, 8
        $region16: #{tpu_custom_call.1} parent=11 // pred_fallthru
          _
        // Predicated region
        $region17: #{tpu_custom_call.1} parent=11 // pred_check
          %p267 = pneg %p77
        $region18: #{tpu_custom_call.1} parent=11 // pred_check_branch
          %269 = sbr.rel (%p267) target = $region20
        $region19: #{tpu_custom_call.1} parent=11 // pred_region
          %271 = vsyncadd [#allocation8], 0
          %s272 = sshll.u32 %s1, 4
          %s273 = int_to_ptr.hbm [resolvable:$true] %s272
          %s274 = sshll.u32 [#allocation7], 4
          %s275 = int_to_ptr.vmem [resolvable:$true] %s274
          %280 = dma.hbm_to_vmem [thread:$0]  %s273, 2048, %s275, [#allocation8], 64, 64, 4
        $region20: #{tpu_custom_call.1} parent=11 // pred_fallthru
          _
        // Predicated region
        $region21: #{tpu_custom_call.1} parent=11 // pred_check
          %p281 = pneg %p150
        $region22: #{tpu_custom_call.1} parent=11 // pred_check_branch
          %283 = sbr.rel (%p281) target = $region24
        $region23: #{tpu_custom_call.1} parent=11 // pred_region
          _
        $region24: #{tpu_custom_call.1} parent=11 // pred_fallthru
          _
        // Predicated region
        $region25: #{tpu_custom_call.1} parent=11 // pred_check
          %p284 = pneg %p171
        $region26: #{tpu_custom_call.1} parent=11 // pred_check_branch
          %286 = sbr.rel (%p284) target = $region28
        $region27: #{tpu_custom_call.1} parent=11 // pred_region
          _
        $region28: #{tpu_custom_call.1} parent=11 // pred_fallthru
          _
        // Predicated region
        $region29: #{tpu_custom_call.1} parent=11 // pred_check
          %p287 = pneg %p192
        $region30: #{tpu_custom_call.1} parent=11 // pred_check_branch
          %289 = sbr.rel (%p287) target = $region32
        $region31: #{tpu_custom_call.1} parent=11 // pred_region
          _
        $region32: #{tpu_custom_call.1} parent=11 // pred_fallthru
          _
        // Predicated region
        $region33: #{tpu_custom_call.1} parent=11 // pred_check
          %p290 = pneg %p213
        $region34: #{tpu_custom_call.1} parent=11 // pred_check_branch
          %292 = sbr.rel (%p290) target = $region36
        $region35: #{tpu_custom_call.1} parent=11 // pred_region
          _
        $region36: #{tpu_custom_call.1} parent=11 // pred_fallthru
          _
      $region12: #{tpu_custom_call.1} parent=5 // pred_fallthru
        _
      %p293 = scmp.lt.s32.totalorder %s18, 3
      // Predicated region
      $region37: #{tpu_custom_call.1} parent=5 // pred_check
        %p294 = pneg %p293
      $region38: #{tpu_custom_call.1} parent=5 // pred_check_branch
        %296 = sbr.rel (%p294) target = $region40
      $region39: #{tpu_custom_call.1} parent=5 // pred_region
        // Predicated region
        $region41: #{tpu_custom_call.1} parent=39 // pred_check
          %p297 = pneg %p97
        $region42: #{tpu_custom_call.1} parent=39 // pred_check_branch
          %299 = sbr.rel (%p297) target = $region44
        $region43: #{tpu_custom_call.1} parent=39 // pred_region
          %s300 = sand.u32 %s18, 1
          %s301 = scalar_lea.sflag [#allocation6], %s300
          %s302 = sand.u32 %s87, 1
          %s303 = smul.addr %s302, 64
          %s304 = scalar_lea.vmem [#allocation9], %s303
          %306 = vsyncadd %s301, 0
          %s307 = smul.addr %s25, 16
          %s308 = smul.addr %s307, 4
          %s309 = scalar_lea.hbm %s2, %s308
          %s310 = sshll.u32 %s309, 4
          %s311 = int_to_ptr.hbm [resolvable:$true] %s310
          %s312 = sshll.u32 %s304, 4
          %s313 = int_to_ptr.vmem [resolvable:$true] %s312
          %318 = dma.hbm_to_vmem [thread:$0]  %s311, 1024, %s313, %s301, 64, 64, 4
        $region44: #{tpu_custom_call.1} parent=39 // pred_fallthru
          _
        // Predicated region
        $region45: #{tpu_custom_call.1} parent=39 // pred_check
          %p319 = pneg %p123
        $region46: #{tpu_custom_call.1} parent=39 // pred_check_branch
          %321 = sbr.rel (%p319) target = $region48
        $region47: #{tpu_custom_call.1} parent=39 // pred_region
          %p322 = scmp.lt.s32.totalorder %s25, 2
          %s323 = scalar_select %p322, %s25, 2
          %s324 = scalar_lea.vmem %s3, %s323
        $region48: #{tpu_custom_call.1} parent=39 // pred_fallthru
          _
      $region40: #{tpu_custom_call.1} parent=5 // pred_fallthru
        _
      %p325 = scmp.le.s32.totalorder 1, %s18
      %p326 = scmp.lt.s32.totalorder %s18, 4
      %p327 = pnand %p325, %p326
      %p328 = pneg %p327
      // Predicated region
      $region49: #{tpu_custom_call.1} parent=5 // pred_check
        _
      $region50: #{tpu_custom_call.1} parent=5 // pred_check_branch
        %330 = sbr.rel (%p327) target = $region52
      $region51: #{tpu_custom_call.1} parent=5 // pred_region
        %s331 = ssub.s32 %s18, 1
        // Predicated region
        $region53: #{tpu_custom_call.1} parent=51 // pred_check
          %p332 = pneg %p56
        $region54: #{tpu_custom_call.1} parent=51 // pred_check_branch
          %334 = sbr.rel (%p332) target = $region56
        $region55: #{tpu_custom_call.1} parent=51 // pred_region
          %336 = dma.done [#allocation6], 4096
        $region56: #{tpu_custom_call.1} parent=51 // pred_fallthru
          _
        // Predicated region
        $region57: #{tpu_custom_call.1} parent=51 // pred_check
          %p337 = pneg %p77
        $region58: #{tpu_custom_call.1} parent=51 // pred_check_branch
          %339 = sbr.rel (%p337) target = $region60
        $region59: #{tpu_custom_call.1} parent=51 // pred_region
          %341 = dma.done [#allocation8], 2048
        $region60: #{tpu_custom_call.1} parent=51 // pred_fallthru
          _
        %s342 = sand.u32 %s23, 1
        %s343 = scalar_lea.sflag [#allocation6], %s342
        %s344 = sand.u32 %s90, 1
        %s345 = smul.addr %s344, 64
        %s346 = scalar_lea.vmem [#allocation9], %s345
        // Predicated region
        $region61: #{tpu_custom_call.1} parent=51 // pred_check
          %p347 = pneg %p103
        $region62: #{tpu_custom_call.1} parent=51 // pred_check_branch
          %349 = sbr.rel (%p347) target = $region64
        $region63: #{tpu_custom_call.1} parent=51 // pred_region
          %351 = dma.done %s343, 1024
        $region64: #{tpu_custom_call.1} parent=51 // pred_fallthru
          _
        %p352 = pneg %p56
        %p353 = pneg %p53
        %p354 = pneg %p77
        %p355 = pneg %p74
        %s356 = sand.u32 %s23, 1
        %s357 = scalar_lea.sflag [#allocation6], %s356
        %s358 = sand.u32 %s90, 1
        %s359 = smul.addr %s358, 64
        %s360 = scalar_lea.vmem [#allocation9], %s359
        %p361 = pneg %p103
        %p362 = pneg %p100
        %p363 = scmp.lt.s32.totalorder %s27, 2
        %s364 = scalar_select %p363, %s27, 2
        %s365 = scalar_lea.vmem %s3, %s364
        %p366 = pneg %p129
        %p367 = pneg %p126
        %p368 = pneg %p150
        %p369 = pneg %p147
        %p370 = pneg %p171
        %p371 = pneg %p168
        %p372 = pneg %p192
        %p373 = pneg %p189
        %p374 = pneg %p213
        %p375 = pneg %p210
        %p376 = pneg %p234
        %p377 = pneg %p231
        %s378 = smul.u32 32, %s28
        %p379 = scmp.lt.s32.totalorder %s27, 2
        %s380 = scalar_select %p379, %s27, 2
        %s381 = scalar_lea.vmem %s3, %s380
        %p382 = scmp.eq.s32.totalorder %s28, 0
        // Predicated region
        $region65: #{tpu_custom_call.1} parent=51 // pred_check
          %p383 = pneg %p382
        $region66: #{tpu_custom_call.1} parent=51 // pred_check_branch
          %385 = sbr.rel (%p383) target = $region68
        $region67: #{tpu_custom_call.1} parent=51 // pred_region
          %p386 = scmp.eq.s32.totalorder %s27, 0
          // Predicated region
          $region69: #{tpu_custom_call.1} parent=67 // pred_check
            %p387 = pneg %p386
          $region70: #{tpu_custom_call.1} parent=67 // pred_check_branch
            %389 = sbr.rel (%p387) target = $region72
          $region71: #{tpu_custom_call.1} parent=67 // pred_region
            %v390 = vld [vmem:[#allocation7] sm:$0xf]
            %v391 = vld [vmem:[#allocation7 + $0x4] sm:$0xf]
            %v392 = vld [vmem:[#allocation7 + $0x8] sm:$0xf]
            %v393 = vld [vmem:[#allocation7 + $0xc] sm:$0xf]
            %v394 = vld [vmem:[#allocation7 + $0x10] sm:$0xf]
            %v395 = vld [vmem:[#allocation7 + $0x14] sm:$0xf]
            %v396 = vld [vmem:[#allocation7 + $0x18] sm:$0xf]
            %v397 = vld [vmem:[#allocation7 + $0x1c] sm:$0xf]
            %v398 = vld [vmem:[#allocation7 + $0x20] sm:$0xf]
            %v399 = vld [vmem:[#allocation7 + $0x24] sm:$0xf]
            %v400 = vld [vmem:[#allocation7 + $0x28] sm:$0xf]
            %v401 = vld [vmem:[#allocation7 + $0x2c] sm:$0xf]
            %v402 = vld [vmem:[#allocation7 + $0x30] sm:$0xf]
            %v403 = vld [vmem:[#allocation7 + $0x34] sm:$0xf]
            %v404 = vld [vmem:[#allocation7 + $0x38] sm:$0xf]
            %v405 = vld [vmem:[#allocation7 + $0x3c] sm:$0xf]
            %v406 = vld [vmem:[#allocation7 + $0x40] sm:$0xf]
            %v407 = vld [vmem:[#allocation7 + $0x44] sm:$0xf]
            %v408 = vld [vmem:[#allocation7 + $0x48] sm:$0xf]
            %v409 = vld [vmem:[#allocation7 + $0x4c] sm:$0xf]
            %v410 = vld [vmem:[#allocation7 + $0x50] sm:$0xf]
            %v411 = vld [vmem:[#allocation7 + $0x54] sm:$0xf]
            %v412 = vld [vmem:[#allocation7 + $0x58] sm:$0xf]
            %v413 = vld [vmem:[#allocation7 + $0x5c] sm:$0xf]
            %v414 = vld [vmem:[#allocation7 + $0x60] sm:$0xf]
            %v415 = vld [vmem:[#allocation7 + $0x64] sm:$0xf]
            %v416 = vld [vmem:[#allocation7 + $0x68] sm:$0xf]
            %v417 = vld [vmem:[#allocation7 + $0x6c] sm:$0xf]
            %v418 = vld [vmem:[#allocation7 + $0x70] sm:$0xf]
            %v419 = vld [vmem:[#allocation7 + $0x74] sm:$0xf]
            %v420 = vld [vmem:[#allocation7 + $0x78] sm:$0xf]
            %v421 = vld [vmem:[#allocation7 + $0x7c] sm:$0xf]
            %422 = vst [vmem:[#allocation3] sm:$0xf] %v390
            %423 = vst [vmem:[#allocation3 + $0x4] sm:$0xf] %v391
            %424 = vst [vmem:[#allocation3 + $0x8] sm:$0xf] %v392
            %425 = vst [vmem:[#allocation3 + $0xc] sm:$0xf] %v393
            %426 = vst [vmem:[#allocation3 + $0x10] sm:$0xf] %v394
            %427 = vst [vmem:[#allocation3 + $0x14] sm:$0xf] %v395
            %428 = vst [vmem:[#allocation3 + $0x18] sm:$0xf] %v396
            %429 = vst [vmem:[#allocation3 + $0x1c] sm:$0xf] %v397
            %430 = vst [vmem:[#allocation3 + $0x20] sm:$0xf] %v398
            %431 = vst [vmem:[#allocation3 + $0x24] sm:$0xf] %v399
            %432 = vst [vmem:[#allocation3 + $0x28] sm:$0xf] %v400
            %433 = vst [vmem:[#allocation3 + $0x2c] sm:$0xf] %v401
            %434 = vst [vmem:[#allocation3 + $0x30] sm:$0xf] %v402
            %435 = vst [vmem:[#allocation3 + $0x34] sm:$0xf] %v403
            %436 = vst [vmem:[#allocation3 + $0x38] sm:$0xf] %v404
            %437 = vst [vmem:[#allocation3 + $0x3c] sm:$0xf] %v405
            %438 = vst [vmem:[#allocation3 + $0x40] sm:$0xf] %v406
            %439 = vst [vmem:[#allocation3 + $0x44] sm:$0xf] %v407
            %440 = vst [vmem:[#allocation3 + $0x48] sm:$0xf] %v408
            %441 = vst [vmem:[#allocation3 + $0x4c] sm:$0xf] %v409
            %442 = vst [vmem:[#allocation3 + $0x50] sm:$0xf] %v410
            %443 = vst [vmem:[#allocation3 + $0x54] sm:$0xf] %v411
            %444 = vst [vmem:[#allocation3 + $0x58] sm:$0xf] %v412
            %445 = vst [vmem:[#allocation3 + $0x5c] sm:$0xf] %v413
            %446 = vst [vmem:[#allocation3 + $0x60] sm:$0xf] %v414
            %447 = vst [vmem:[#allocation3 + $0x64] sm:$0xf] %v415
            %448 = vst [vmem:[#allocation3 + $0x68] sm:$0xf] %v416
            %449 = vst [vmem:[#allocation3 + $0x6c] sm:$0xf] %v417
            %450 = vst [vmem:[#allocation3 + $0x70] sm:$0xf] %v418
            %451 = vst [vmem:[#allocation3 + $0x74] sm:$0xf] %v419
            %452 = vst [vmem:[#allocation3 + $0x78] sm:$0xf] %v420
            %453 = vst [vmem:[#allocation3 + $0x7c] sm:$0xf] %v421
          $region72: #{tpu_custom_call.1} parent=67 // pred_fallthru
            _
          %p454 = scmp.gt.s32.totalorder %s27, 0
          // Predicated region
          $region73: #{tpu_custom_call.1} parent=67 // pred_check
            %p455 = pneg %p454
          $region74: #{tpu_custom_call.1} parent=67 // pred_check_branch
            %457 = sbr.rel (%p455) target = $region76
          $region75: #{tpu_custom_call.1} parent=67 // pred_region
            %v458 = vld [vmem:[#allocation2] sm:$0xff]
            %v459 = vld [vmem:[#allocation2 + $0x8] sm:$0xff]
            %v460 = vld [vmem:[#allocation2 + $0x10] sm:$0xff]
            %v461 = vld [vmem:[#allocation2 + $0x18] sm:$0xff]
            %v462 = vld [vmem:[#allocation2 + $0x20] sm:$0xff]
            %v463 = vld [vmem:[#allocation2 + $0x28] sm:$0xff]
            %v464 = vld [vmem:[#allocation2 + $0x30] sm:$0xff]
            %v465 = vld [vmem:[#allocation2 + $0x38] sm:$0xff]
            %v466 = vld [vmem:[#allocation2 + $0x40] sm:$0xff]
            %v467 = vld [vmem:[#allocation2 + $0x48] sm:$0xff]
            %v468 = vld [vmem:[#allocation2 + $0x50] sm:$0xff]
            %v469 = vld [vmem:[#allocation2 + $0x58] sm:$0xff]
            %v470 = vld [vmem:[#allocation2 + $0x60] sm:$0xff]
            %v471 = vld [vmem:[#allocation2 + $0x68] sm:$0xff]
            %v472 = vld [vmem:[#allocation2 + $0x70] sm:$0xff]
            %v473 = vld [vmem:[#allocation2 + $0x78] sm:$0xff]
            %v474 = vld [vmem:[#allocation2 + $0x80] sm:$0xff]
            %v475 = vld [vmem:[#allocation2 + $0x88] sm:$0xff]
            %v476 = vld [vmem:[#allocation2 + $0x90] sm:$0xff]
            %v477 = vld [vmem:[#allocation2 + $0x98] sm:$0xff]
            %v478 = vld [vmem:[#allocation2 + $0xa0] sm:$0xff]
            %v479 = vld [vmem:[#allocation2 + $0xa8] sm:$0xff]
            %v480 = vld [vmem:[#allocation2 + $0xb0] sm:$0xff]
            %v481 = vld [vmem:[#allocation2 + $0xb8] sm:$0xff]
            %v482 = vld [vmem:[#allocation2 + $0xc0] sm:$0xff]
            %v483 = vld [vmem:[#allocation2 + $0xc8] sm:$0xff]
            %v484 = vld [vmem:[#allocation2 + $0xd0] sm:$0xff]
            %v485 = vld [vmem:[#allocation2 + $0xd8] sm:$0xff]
            %v486 = vld [vmem:[#allocation2 + $0xe0] sm:$0xff]
            %v487 = vld [vmem:[#allocation2 + $0xe8] sm:$0xff]
            %v488 = vld [vmem:[#allocation2 + $0xf0] sm:$0xff]
            %v489 = vld [vmem:[#allocation2 + $0xf8] sm:$0xff]
            %v490 = vpack.c.bf16 %v459, %v458
            %v491 = vpack.c.bf16 %v461, %v460
            %v492 = vpack.c.bf16 %v463, %v462
            %v493 = vpack.c.bf16 %v465, %v464
            %v494 = vpack.c.bf16 %v467, %v466
            %v495 = vpack.c.bf16 %v469, %v468
            %v496 = vpack.c.bf16 %v471, %v470
            %v497 = vpack.c.bf16 %v473, %v472
            %v498 = vpack.c.bf16 %v475, %v474
            %v499 = vpack.c.bf16 %v477, %v476
            %v500 = vpack.c.bf16 %v479, %v478
            %v501 = vpack.c.bf16 %v481, %v480
            %v502 = vpack.c.bf16 %v483, %v482
            %v503 = vpack.c.bf16 %v485, %v484
            %v504 = vpack.c.bf16 %v487, %v486
            %v505 = vpack.c.bf16 %v489, %v488
            %v506 = vld [vmem:[%s346] sm:$0xf]
            %v507 = vld [vmem:[%s346 + $0x4] sm:$0xf]
            %v508 = vld [vmem:[%s346 + $0x8] sm:$0xf]
            %v509 = vld [vmem:[%s346 + $0xc] sm:$0xf]
            %v510 = vld [vmem:[%s346 + $0x10] sm:$0xf]
            %v511 = vld [vmem:[%s346 + $0x14] sm:$0xf]
            %v512 = vld [vmem:[%s346 + $0x18] sm:$0xf]
            %v513 = vld [vmem:[%s346 + $0x1c] sm:$0xf]
            %v514 = vld [vmem:[%s346 + $0x20] sm:$0xf]
            %v515 = vld [vmem:[%s346 + $0x24] sm:$0xf]
            %v516 = vld [vmem:[%s346 + $0x28] sm:$0xf]
            %v517 = vld [vmem:[%s346 + $0x2c] sm:$0xf]
            %v518 = vld [vmem:[%s346 + $0x30] sm:$0xf]
            %v519 = vld [vmem:[%s346 + $0x34] sm:$0xf]
            %v520 = vld [vmem:[%s346 + $0x38] sm:$0xf]
            %v521 = vld [vmem:[%s346 + $0x3c] sm:$0xf]
            %v538 = vunpack.c.l.b16 %v506
            %v539 = vunpack.c.l.b16 %v507
            %v540 = vunpack.c.l.b16 %v508
            %v541 = vunpack.c.l.b16 %v509
            %v542 = vunpack.c.l.b16 %v510
            %v543 = vunpack.c.l.b16 %v511
            %v544 = vunpack.c.l.b16 %v512
            %v545 = vunpack.c.l.b16 %v513
            %v546 = vunpack.c.l.b16 %v514
            %v547 = vunpack.c.l.b16 %v515
            %v548 = vunpack.c.l.b16 %v516
            %v549 = vunpack.c.l.b16 %v517
            %v550 = vunpack.c.l.b16 %v518
            %v551 = vunpack.c.l.b16 %v519
            %v552 = vunpack.c.l.b16 %v520
            %v553 = vunpack.c.l.b16 %v521
            %v554 = vpack.c.b16 %v539, %v538
            %v555 = vpack.c.b16 %v541, %v540
            %v556 = vpack.c.b16 %v543, %v542
            %v557 = vpack.c.b16 %v545, %v544
            %v558 = vpack.c.b16 %v547, %v546
            %v559 = vpack.c.b16 %v549, %v548
            %v560 = vpack.c.b16 %v551, %v550
            %v561 = vpack.c.b16 %v553, %v552
            %570 = vmatpush.bf16.msra.mxu0 %v561
            %571 = vmatpush.bf16.msra.mxu0 %v560
            %572 = vmatpush.bf16.msra.mxu0 %v559
            %573 = vmatpush.bf16.msra.mxu0 %v558
            %574 = vmatpush.bf16.msra.mxu0 %v557
            %575 = vmatpush.bf16.msra.mxu0 %v556
            %576 = vmatpush.bf16.msra.mxu0 %v555
            %577 = vmatpush.bf16.msra.mxu0 %v554
            %578 = vmatmul.bf16.gmra.mxu0 %v490
            %v579 = vpop.f32.mrf.mxu0
            %v580 = vadd.f32 0.0, %v579
            %v581 = vpop.f32.mrf.mxu0
            %v582 = vadd.f32 0.0, %v581
            %583 = vmatmul.bf16.gmra.mxu0 %v491
            %v584 = vpop.f32.mrf.mxu0
            %v585 = vadd.f32 0.0, %v584
            %v586 = vpop.f32.mrf.mxu0
            %v587 = vadd.f32 0.0, %v586
            %588 = vmatmul.bf16.gmra.mxu0 %v492
            %v589 = vpop.f32.mrf.mxu0
            %v590 = vadd.f32 0.0, %v589
            %v591 = vpop.f32.mrf.mxu0
            %v592 = vadd.f32 0.0, %v591
            %593 = vmatmul.bf16.gmra.mxu0 %v493
            %v594 = vpop.f32.mrf.mxu0
            %v595 = vadd.f32 0.0, %v594
            %v596 = vpop.f32.mrf.mxu0
            %v597 = vadd.f32 0.0, %v596
            %598 = vmatmul.bf16.gmra.mxu0 %v494
            %v599 = vpop.f32.mrf.mxu0
            %v600 = vadd.f32 0.0, %v599
            %v601 = vpop.f32.mrf.mxu0
            %v602 = vadd.f32 0.0, %v601
            %603 = vmatmul.bf16.gmra.mxu0 %v495
            %v604 = vpop.f32.mrf.mxu0
            %v605 = vadd.f32 0.0, %v604
            %v606 = vpop.f32.mrf.mxu0
            %v607 = vadd.f32 0.0, %v606
            %608 = vmatmul.bf16.gmra.mxu0 %v496
            %v609 = vpop.f32.mrf.mxu0
            %v610 = vadd.f32 0.0, %v609
            %v611 = vpop.f32.mrf.mxu0
            %v612 = vadd.f32 0.0, %v611
            %613 = vmatmul.bf16.gmra.mxu0 %v497
            %v614 = vpop.f32.mrf.mxu0
            %v615 = vadd.f32 0.0, %v614
            %v616 = vpop.f32.mrf.mxu0
            %v617 = vadd.f32 0.0, %v616
            %618 = vmatmul.bf16.gmra.mxu0 %v498
            %v619 = vpop.f32.mrf.mxu0
            %v620 = vadd.f32 0.0, %v619
            %v621 = vpop.f32.mrf.mxu0
            %v622 = vadd.f32 0.0, %v621
            %623 = vmatmul.bf16.gmra.mxu0 %v499
            %v624 = vpop.f32.mrf.mxu0
            %v625 = vadd.f32 0.0, %v624
            %v626 = vpop.f32.mrf.mxu0
            %v627 = vadd.f32 0.0, %v626
            %628 = vmatmul.bf16.gmra.mxu0 %v500
            %v629 = vpop.f32.mrf.mxu0
            %v630 = vadd.f32 0.0, %v629
            %v631 = vpop.f32.mrf.mxu0
            %v632 = vadd.f32 0.0, %v631
            %633 = vmatmul.bf16.gmra.mxu0 %v501
            %v634 = vpop.f32.mrf.mxu0
            %v635 = vadd.f32 0.0, %v634
            %v636 = vpop.f32.mrf.mxu0
            %v637 = vadd.f32 0.0, %v636
            %638 = vmatmul.bf16.gmra.mxu0 %v502
            %v639 = vpop.f32.mrf.mxu0
            %v640 = vadd.f32 0.0, %v639
            %v641 = vpop.f32.mrf.mxu0
            %v642 = vadd.f32 0.0, %v641
            %643 = vmatmul.bf16.gmra.mxu0 %v503
            %v644 = vpop.f32.mrf.mxu0
            %v645 = vadd.f32 0.0, %v644
            %v646 = vpop.f32.mrf.mxu0
            %v647 = vadd.f32 0.0, %v646
            %648 = vmatmul.bf16.gmra.mxu0 %v504
            %v649 = vpop.f32.mrf.mxu0
            %v650 = vadd.f32 0.0, %v649
            %v651 = vpop.f32.mrf.mxu0
            %v652 = vadd.f32 0.0, %v651
            %653 = vmatmul.bf16.gmra.mxu0 %v505
            %v654 = vpop.f32.mrf.mxu0
            %v655 = vadd.f32 0.0, %v654
            %v656 = vpop.f32.mrf.mxu0
            %v657 = vadd.f32 0.0, %v656
            %658 = vdwg.mxu0
            %v659 = vpack.c.bf16 %v580, %v580
            %v660 = vpack.c.bf16 %v582, %v582
            %v661 = vpack.c.bf16 %v585, %v585
            %v662 = vpack.c.bf16 %v587, %v587
            %v663 = vpack.c.bf16 %v590, %v590
            %v664 = vpack.c.bf16 %v592, %v592
            %v665 = vpack.c.bf16 %v595, %v595
            %v666 = vpack.c.bf16 %v597, %v597
            %v667 = vpack.c.bf16 %v600, %v600
            %v668 = vpack.c.bf16 %v602, %v602
            %v669 = vpack.c.bf16 %v605, %v605
            %v670 = vpack.c.bf16 %v607, %v607
            %v671 = vpack.c.bf16 %v610, %v610
            %v672 = vpack.c.bf16 %v612, %v612
            %v673 = vpack.c.bf16 %v615, %v615
            %v674 = vpack.c.bf16 %v617, %v617
            %v675 = vpack.c.bf16 %v620, %v620
            %v676 = vpack.c.bf16 %v622, %v622
            %v677 = vpack.c.bf16 %v625, %v625
            %v678 = vpack.c.bf16 %v627, %v627
            %v679 = vpack.c.bf16 %v630, %v630
            %v680 = vpack.c.bf16 %v632, %v632
            %v681 = vpack.c.bf16 %v635, %v635
            %v682 = vpack.c.bf16 %v637, %v637
            %v683 = vpack.c.bf16 %v640, %v640
            %v684 = vpack.c.bf16 %v642, %v642
            %v685 = vpack.c.bf16 %v645, %v645
            %v686 = vpack.c.bf16 %v647, %v647
            %v687 = vpack.c.bf16 %v650, %v650
            %v688 = vpack.c.bf16 %v652, %v652
            %v689 = vpack.c.bf16 %v655, %v655
            %v690 = vpack.c.bf16 %v657, %v657
            %691 = vst [vmem:[#allocation3] sm:$0xf] %v659
            %692 = vst [vmem:[#allocation3 + $0x4] sm:$0xf] %v660
            %693 = vst [vmem:[#allocation3 + $0x8] sm:$0xf] %v661
            %694 = vst [vmem:[#allocation3 + $0xc] sm:$0xf] %v662
            %695 = vst [vmem:[#allocation3 + $0x10] sm:$0xf] %v663
            %696 = vst [vmem:[#allocation3 + $0x14] sm:$0xf] %v664
            %697 = vst [vmem:[#allocation3 + $0x18] sm:$0xf] %v665
            %698 = vst [vmem:[#allocation3 + $0x1c] sm:$0xf] %v666
            %699 = vst [vmem:[#allocation3 + $0x20] sm:$0xf] %v667
            %700 = vst [vmem:[#allocation3 + $0x24] sm:$0xf] %v668
            %701 = vst [vmem:[#allocation3 + $0x28] sm:$0xf] %v669
            %702 = vst [vmem:[#allocation3 + $0x2c] sm:$0xf] %v670
            %703 = vst [vmem:[#allocation3 + $0x30] sm:$0xf] %v671
            %704 = vst [vmem:[#allocation3 + $0x34] sm:$0xf] %v672
            %705 = vst [vmem:[#allocation3 + $0x38] sm:$0xf] %v673
            %706 = vst [vmem:[#allocation3 + $0x3c] sm:$0xf] %v674
            %707 = vst [vmem:[#allocation3 + $0x40] sm:$0xf] %v675
            %708 = vst [vmem:[#allocation3 + $0x44] sm:$0xf] %v676
            %709 = vst [vmem:[#allocation3 + $0x48] sm:$0xf] %v677
            %710 = vst [vmem:[#allocation3 + $0x4c] sm:$0xf] %v678
            %711 = vst [vmem:[#allocation3 + $0x50] sm:$0xf] %v679
            %712 = vst [vmem:[#allocation3 + $0x54] sm:$0xf] %v680
            %713 = vst [vmem:[#allocation3 + $0x58] sm:$0xf] %v681
            %714 = vst [vmem:[#allocation3 + $0x5c] sm:$0xf] %v682
            %715 = vst [vmem:[#allocation3 + $0x60] sm:$0xf] %v683
            %716 = vst [vmem:[#allocation3 + $0x64] sm:$0xf] %v684
            %717 = vst [vmem:[#allocation3 + $0x68] sm:$0xf] %v685
            %718 = vst [vmem:[#allocation3 + $0x6c] sm:$0xf] %v686
            %719 = vst [vmem:[#allocation3 + $0x70] sm:$0xf] %v687
            %720 = vst [vmem:[#allocation3 + $0x74] sm:$0xf] %v688
            %721 = vst [vmem:[#allocation3 + $0x78] sm:$0xf] %v689
            %722 = vst [vmem:[#allocation3 + $0x7c] sm:$0xf] %v690
          $region76: #{tpu_custom_call.1} parent=67 // pred_fallthru
            _
        $region68: #{tpu_custom_call.1} parent=51 // pred_fallthru
          _
        %v723 = vld [vmem:[#allocation5] sm:$0xff]
        %v724 = vld [vmem:[#allocation5 + $0x8] sm:$0xff]
        %v725 = vld [vmem:[#allocation5 + $0x10] sm:$0xff]
        %v726 = vld [vmem:[#allocation5 + $0x18] sm:$0xff]
        %v727 = vld [vmem:[#allocation5 + $0x20] sm:$0xff]
        %v728 = vld [vmem:[#allocation5 + $0x28] sm:$0xff]
        %v729 = vld [vmem:[#allocation5 + $0x30] sm:$0xff]
        %v730 = vld [vmem:[#allocation5 + $0x38] sm:$0xff]
        %v731 = vld [vmem:[#allocation5 + $0x40] sm:$0xff]
        %v732 = vld [vmem:[#allocation5 + $0x48] sm:$0xff]
        %v733 = vld [vmem:[#allocation5 + $0x50] sm:$0xff]
        %v734 = vld [vmem:[#allocation5 + $0x58] sm:$0xff]
        %v735 = vld [vmem:[#allocation5 + $0x60] sm:$0xff]
        %v736 = vld [vmem:[#allocation5 + $0x68] sm:$0xff]
        %v737 = vld [vmem:[#allocation5 + $0x70] sm:$0xff]
        %v738 = vld [vmem:[#allocation5 + $0x78] sm:$0xff]
        %v739 = vld [vmem:[#allocation5 + $0x80] sm:$0xff]
        %v740 = vld [vmem:[#allocation5 + $0x88] sm:$0xff]
        %v741 = vld [vmem:[#allocation5 + $0x90] sm:$0xff]
        %v742 = vld [vmem:[#allocation5 + $0x98] sm:$0xff]
        %v743 = vld [vmem:[#allocation5 + $0xa0] sm:$0xff]
        %v744 = vld [vmem:[#allocation5 + $0xa8] sm:$0xff]
        %v745 = vld [vmem:[#allocation5 + $0xb0] sm:$0xff]
        %v746 = vld [vmem:[#allocation5 + $0xb8] sm:$0xff]
        %v747 = vld [vmem:[#allocation5 + $0xc0] sm:$0xff]
        %v748 = vld [vmem:[#allocation5 + $0xc8] sm:$0xff]
        %v749 = vld [vmem:[#allocation5 + $0xd0] sm:$0xff]
        %v750 = vld [vmem:[#allocation5 + $0xd8] sm:$0xff]
        %v751 = vld [vmem:[#allocation5 + $0xe0] sm:$0xff]
        %v752 = vld [vmem:[#allocation5 + $0xe8] sm:$0xff]
        %v753 = vld [vmem:[#allocation5 + $0xf0] sm:$0xff]
        %v754 = vld [vmem:[#allocation5 + $0xf8] sm:$0xff]
        %v755 = vld [vmem:[#allocation3] sm:$0xf]
        %v756 = vld [vmem:[#allocation3 + $0x4] sm:$0xf]
        %v757 = vld [vmem:[#allocation3 + $0x8] sm:$0xf]
        %v758 = vld [vmem:[#allocation3 + $0xc] sm:$0xf]
        %v759 = vld [vmem:[#allocation3 + $0x10] sm:$0xf]
        %v760 = vld [vmem:[#allocation3 + $0x14] sm:$0xf]
        %v761 = vld [vmem:[#allocation3 + $0x18] sm:$0xf]
        %v762 = vld [vmem:[#allocation3 + $0x1c] sm:$0xf]
        %v763 = vld [vmem:[#allocation3 + $0x20] sm:$0xf]
        %v764 = vld [vmem:[#allocation3 + $0x24] sm:$0xf]
        %v765 = vld [vmem:[#allocation3 + $0x28] sm:$0xf]
        %v766 = vld [vmem:[#allocation3 + $0x2c] sm:$0xf]
        %v767 = vld [vmem:[#allocation3 + $0x30] sm:$0xf]
        %v768 = vld [vmem:[#allocation3 + $0x34] sm:$0xf]
        %v769 = vld [vmem:[#allocation3 + $0x38] sm:$0xf]
        %v770 = vld [vmem:[#allocation3 + $0x3c] sm:$0xf]
        %v771 = vld [vmem:[#allocation3 + $0x40] sm:$0xf]
        %v772 = vld [vmem:[#allocation3 + $0x44] sm:$0xf]
        %v773 = vld [vmem:[#allocation3 + $0x48] sm:$0xf]
        %v774 = vld [vmem:[#allocation3 + $0x4c] sm:$0xf]
        %v775 = vld [vmem:[#allocation3 + $0x50] sm:$0xf]
        %v776 = vld [vmem:[#allocation3 + $0x54] sm:$0xf]
        %v777 = vld [vmem:[#allocation3 + $0x58] sm:$0xf]
        %v778 = vld [vmem:[#allocation3 + $0x5c] sm:$0xf]
        %v779 = vld [vmem:[#allocation3 + $0x60] sm:$0xf]
        %v780 = vld [vmem:[#allocation3 + $0x64] sm:$0xf]
        %v781 = vld [vmem:[#allocation3 + $0x68] sm:$0xf]
        %v782 = vld [vmem:[#allocation3 + $0x6c] sm:$0xf]
        %v783 = vld [vmem:[#allocation3 + $0x70] sm:$0xf]
        %v784 = vld [vmem:[#allocation3 + $0x74] sm:$0xf]
        %v785 = vld [vmem:[#allocation3 + $0x78] sm:$0xf]
        %v786 = vld [vmem:[#allocation3 + $0x7c] sm:$0xf]
        %v787 = vld [vmem:[%s381] sm:$0x1]
        %v789 = vperm.slane %v787, 0
        %v823 = vunpack.c.l.b16 %v723
        %v824 = vunpack.c.h.b16 %v723
        %v825 = vunpack.c.l.b16 %v724
        %v826 = vunpack.c.h.b16 %v724
        %v827 = vunpack.c.l.b16 %v725
        %v828 = vunpack.c.h.b16 %v725
        %v829 = vunpack.c.l.b16 %v726
        %v830 = vunpack.c.h.b16 %v726
        %v831 = vunpack.c.l.b16 %v727
        %v832 = vunpack.c.h.b16 %v727
        %v833 = vunpack.c.l.b16 %v728
        %v834 = vunpack.c.h.b16 %v728
        %v835 = vunpack.c.l.b16 %v729
        %v836 = vunpack.c.h.b16 %v729
        %v837 = vunpack.c.l.b16 %v730
        %v838 = vunpack.c.h.b16 %v730
        %v839 = vunpack.c.l.b16 %v731
        %v840 = vunpack.c.h.b16 %v731
        %v841 = vunpack.c.l.b16 %v732
        %v842 = vunpack.c.h.b16 %v732
        %v843 = vunpack.c.l.b16 %v733
        %v844 = vunpack.c.h.b16 %v733
        %v845 = vunpack.c.l.b16 %v734
        %v846 = vunpack.c.h.b16 %v734
        %v847 = vunpack.c.l.b16 %v735
        %v848 = vunpack.c.h.b16 %v735
        %v849 = vunpack.c.l.b16 %v736
        %v850 = vunpack.c.h.b16 %v736
        %v851 = vunpack.c.l.b16 %v737
        %v852 = vunpack.c.h.b16 %v737
        %v853 = vunpack.c.l.b16 %v738
        %v854 = vunpack.c.h.b16 %v738
        %v855 = vunpack.c.l.b16 %v739
        %v856 = vunpack.c.h.b16 %v739
        %v857 = vunpack.c.l.b16 %v740
        %v858 = vunpack.c.h.b16 %v740
        %v859 = vunpack.c.l.b16 %v741
        %v860 = vunpack.c.h.b16 %v741
        %v861 = vunpack.c.l.b16 %v742
        %v862 = vunpack.c.h.b16 %v742
        %v863 = vunpack.c.l.b16 %v743
        %v864 = vunpack.c.h.b16 %v743
        %v865 = vunpack.c.l.b16 %v744
        %v866 = vunpack.c.h.b16 %v744
        %v867 = vunpack.c.l.b16 %v745
        %v868 = vunpack.c.h.b16 %v745
        %v869 = vunpack.c.l.b16 %v746
        %v870 = vunpack.c.h.b16 %v746
        %v871 = vunpack.c.l.b16 %v747
        %v872 = vunpack.c.h.b16 %v747
        %v873 = vunpack.c.l.b16 %v748
        %v874 = vunpack.c.h.b16 %v748
        %v875 = vunpack.c.l.b16 %v749
        %v876 = vunpack.c.h.b16 %v749
        %v877 = vunpack.c.l.b16 %v750
        %v878 = vunpack.c.h.b16 %v750
        %v879 = vunpack.c.l.b16 %v751
        %v880 = vunpack.c.h.b16 %v751
        %v881 = vunpack.c.l.b16 %v752
        %v882 = vunpack.c.h.b16 %v752
        %v883 = vunpack.c.l.b16 %v753
        %v884 = vunpack.c.h.b16 %v753
        %v885 = vunpack.c.l.b16 %v754
        %v886 = vunpack.c.h.b16 %v754
        %v887 = vpack.c.b16 %v825, %v823
        %v888 = vpack.c.b16 %v826, %v824
        %v889 = vpack.c.b16 %v829, %v827
        %v890 = vpack.c.b16 %v830, %v828
        %v891 = vpack.c.b16 %v833, %v831
        %v892 = vpack.c.b16 %v834, %v832
        %v893 = vpack.c.b16 %v837, %v835
        %v894 = vpack.c.b16 %v838, %v836
        %v895 = vpack.c.b16 %v841, %v839
        %v896 = vpack.c.b16 %v842, %v840
        %v897 = vpack.c.b16 %v845, %v843
        %v898 = vpack.c.b16 %v846, %v844
        %v899 = vpack.c.b16 %v849, %v847
        %v900 = vpack.c.b16 %v850, %v848
        %v901 = vpack.c.b16 %v853, %v851
        %v902 = vpack.c.b16 %v854, %v852
        %v903 = vpack.c.b16 %v857, %v855
        %v904 = vpack.c.b16 %v858, %v856
        %v905 = vpack.c.b16 %v861, %v859
        %v906 = vpack.c.b16 %v862, %v860
        %v907 = vpack.c.b16 %v865, %v863
        %v908 = vpack.c.b16 %v866, %v864
        %v909 = vpack.c.b16 %v869, %v867
        %v910 = vpack.c.b16 %v870, %v868
        %v911 = vpack.c.b16 %v873, %v871
        %v912 = vpack.c.b16 %v874, %v872
        %v913 = vpack.c.b16 %v877, %v875
        %v914 = vpack.c.b16 %v878, %v876
        %v915 = vpack.c.b16 %v881, %v879
        %v916 = vpack.c.b16 %v882, %v880
        %v917 = vpack.c.b16 %v885, %v883
        %v918 = vpack.c.b16 %v886, %v884
        %v983 = vunpack.c.l.b16 %v755
        %v984 = vunpack.c.l.b16 %v756
        %v985 = vunpack.c.l.b16 %v757
        %v986 = vunpack.c.l.b16 %v758
        %v987 = vunpack.c.l.b16 %v759
        %v988 = vunpack.c.l.b16 %v760
        %v989 = vunpack.c.l.b16 %v761
        %v990 = vunpack.c.l.b16 %v762
        %v991 = vunpack.c.l.b16 %v763
        %v992 = vunpack.c.l.b16 %v764
        %v993 = vunpack.c.l.b16 %v765
        %v994 = vunpack.c.l.b16 %v766
        %v995 = vunpack.c.l.b16 %v767
        %v996 = vunpack.c.l.b16 %v768
        %v997 = vunpack.c.l.b16 %v769
        %v998 = vunpack.c.l.b16 %v770
        %v999 = vunpack.c.l.b16 %v771
        %v1000 = vunpack.c.l.b16 %v772
        %v1001 = vunpack.c.l.b16 %v773
        %v1002 = vunpack.c.l.b16 %v774
        %v1003 = vunpack.c.l.b16 %v775
        %v1004 = vunpack.c.l.b16 %v776
        %v1005 = vunpack.c.l.b16 %v777
        %v1006 = vunpack.c.l.b16 %v778
        %v1007 = vunpack.c.l.b16 %v779
        %v1008 = vunpack.c.l.b16 %v780
        %v1009 = vunpack.c.l.b16 %v781
        %v1010 = vunpack.c.l.b16 %v782
        %v1011 = vunpack.c.l.b16 %v783
        %v1012 = vunpack.c.l.b16 %v784
        %v1013 = vunpack.c.l.b16 %v785
        %v1014 = vunpack.c.l.b16 %v786
        %v1015 = vpack.c.b16 %v984, %v983
        %v1016 = vpack.c.b16 %v986, %v985
        %v1017 = vpack.c.b16 %v988, %v987
        %v1018 = vpack.c.b16 %v990, %v989
        %v1019 = vpack.c.b16 %v992, %v991
        %v1020 = vpack.c.b16 %v994, %v993
        %v1021 = vpack.c.b16 %v996, %v995
        %v1022 = vpack.c.b16 %v998, %v997
        %v1023 = vpack.c.b16 %v1000, %v999
        %v1024 = vpack.c.b16 %v1002, %v1001
        %v1025 = vpack.c.b16 %v1004, %v1003
        %v1026 = vpack.c.b16 %v1006, %v1005
        %v1027 = vpack.c.b16 %v1008, %v1007
        %v1028 = vpack.c.b16 %v1010, %v1009
        %v1029 = vpack.c.b16 %v1012, %v1011
        %v1030 = vpack.c.b16 %v1014, %v1013
        %1047 = vmatpush.bf16.msra.mxu0 %v1022
        %1048 = vmatpush.bf16.msra.mxu0 %v1021
        %1049 = vmatpush.bf16.msra.mxu0 %v1020
        %1050 = vmatpush.bf16.msra.mxu0 %v1019
        %1051 = vmatpush.bf16.msra.mxu0 %v1018
        %1052 = vmatpush.bf16.msra.mxu0 %v1017
        %1053 = vmatpush.bf16.msra.mxu0 %v1016
        %1054 = vmatpush.bf16.msra.mxu0 %v1015
        %1055 = vmatmul.bf16.gmra.mxu0 %v887
        %v1056 = vpop.f32.mrf.mxu0
        %v1057 = vadd.f32 %v789, %v1056
        %v1058 = vpop.f32.mrf.mxu0
        %v1059 = vadd.f32 %v789, %v1058
        %1060 = vmatmul.bf16.gmra.mxu0 %v889
        %v1061 = vpop.f32.mrf.mxu0
        %v1062 = vadd.f32 %v789, %v1061
        %v1063 = vpop.f32.mrf.mxu0
        %v1064 = vadd.f32 %v789, %v1063
        %1065 = vmatmul.bf16.gmra.mxu0 %v891
        %v1066 = vpop.f32.mrf.mxu0
        %v1067 = vadd.f32 %v789, %v1066
        %v1068 = vpop.f32.mrf.mxu0
        %v1069 = vadd.f32 %v789, %v1068
        %1070 = vmatmul.bf16.gmra.mxu0 %v893
        %v1071 = vpop.f32.mrf.mxu0
        %v1072 = vadd.f32 %v789, %v1071
        %v1073 = vpop.f32.mrf.mxu0
        %v1074 = vadd.f32 %v789, %v1073
        %1075 = vmatmul.bf16.gmra.mxu0 %v895
        %v1076 = vpop.f32.mrf.mxu0
        %v1077 = vadd.f32 %v789, %v1076
        %v1078 = vpop.f32.mrf.mxu0
        %v1079 = vadd.f32 %v789, %v1078
        %1080 = vmatmul.bf16.gmra.mxu0 %v897
        %v1081 = vpop.f32.mrf.mxu0
        %v1082 = vadd.f32 %v789, %v1081
        %v1083 = vpop.f32.mrf.mxu0
        %v1084 = vadd.f32 %v789, %v1083
        %1085 = vmatmul.bf16.gmra.mxu0 %v899
        %v1086 = vpop.f32.mrf.mxu0
        %v1087 = vadd.f32 %v789, %v1086
        %v1088 = vpop.f32.mrf.mxu0
        %v1089 = vadd.f32 %v789, %v1088
        %1090 = vmatmul.bf16.gmra.mxu0 %v901
        %v1091 = vpop.f32.mrf.mxu0
        %v1092 = vadd.f32 %v789, %v1091
        %v1093 = vpop.f32.mrf.mxu0
        %v1094 = vadd.f32 %v789, %v1093
        %1095 = vmatmul.bf16.gmra.mxu0 %v903
        %v1096 = vpop.f32.mrf.mxu0
        %v1097 = vadd.f32 %v789, %v1096
        %v1098 = vpop.f32.mrf.mxu0
        %v1099 = vadd.f32 %v789, %v1098
        %1100 = vmatmul.bf16.gmra.mxu0 %v905
        %v1101 = vpop.f32.mrf.mxu0
        %v1102 = vadd.f32 %v789, %v1101
        %v1103 = vpop.f32.mrf.mxu0
        %v1104 = vadd.f32 %v789, %v1103
        %1105 = vmatmul.bf16.gmra.mxu0 %v907
        %v1106 = vpop.f32.mrf.mxu0
        %v1107 = vadd.f32 %v789, %v1106
        %v1108 = vpop.f32.mrf.mxu0
        %v1109 = vadd.f32 %v789, %v1108
        %1110 = vmatmul.bf16.gmra.mxu0 %v909
        %v1111 = vpop.f32.mrf.mxu0
        %v1112 = vadd.f32 %v789, %v1111
        %v1113 = vpop.f32.mrf.mxu0
        %v1114 = vadd.f32 %v789, %v1113
        %1115 = vmatmul.bf16.gmra.mxu0 %v911
        %v1116 = vpop.f32.mrf.mxu0
        %v1117 = vadd.f32 %v789, %v1116
        %v1118 = vpop.f32.mrf.mxu0
        %v1119 = vadd.f32 %v789, %v1118
        %1120 = vmatmul.bf16.gmra.mxu0 %v913
        %v1121 = vpop.f32.mrf.mxu0
        %v1122 = vadd.f32 %v789, %v1121
        %v1123 = vpop.f32.mrf.mxu0
        %v1124 = vadd.f32 %v789, %v1123
        %1125 = vmatmul.bf16.gmra.mxu0 %v915
        %v1126 = vpop.f32.mrf.mxu0
        %v1127 = vadd.f32 %v789, %v1126
        %v1128 = vpop.f32.mrf.mxu0
        %v1129 = vadd.f32 %v789, %v1128
        %1130 = vmatmul.bf16.gmra.mxu0 %v917
        %v1131 = vpop.f32.mrf.mxu0
        %v1132 = vadd.f32 %v789, %v1131
        %v1133 = vpop.f32.mrf.mxu0
        %v1134 = vadd.f32 %v789, %v1133
        %1135 = vdwg.mxu0
        %1136 = vmatpush.bf16.msra.mxu0 %v1030
        %1137 = vmatpush.bf16.msra.mxu0 %v1029
        %1138 = vmatpush.bf16.msra.mxu0 %v1028
        %1139 = vmatpush.bf16.msra.mxu0 %v1027
        %1140 = vmatpush.bf16.msra.mxu0 %v1026
        %1141 = vmatpush.bf16.msra.mxu0 %v1025
        %1142 = vmatpush.bf16.msra.mxu0 %v1024
        %1143 = vmatpush.bf16.msra.mxu0 %v1023
        %1144 = vmatmul.bf16.gmra.mxu0 %v888
        %v1145 = vpop.f32.mrf.mxu0
        %v1146 = vadd.f32 %v1057, %v1145
        %v1147 = vpop.f32.mrf.mxu0
        %v1148 = vadd.f32 %v1059, %v1147
        %1149 = vmatmul.bf16.gmra.mxu0 %v890
        %v1150 = vpop.f32.mrf.mxu0
        %v1151 = vadd.f32 %v1062, %v1150
        %v1152 = vpop.f32.mrf.mxu0
        %v1153 = vadd.f32 %v1064, %v1152
        %1154 = vmatmul.bf16.gmra.mxu0 %v892
        %v1155 = vpop.f32.mrf.mxu0
        %v1156 = vadd.f32 %v1067, %v1155
        %v1157 = vpop.f32.mrf.mxu0
        %v1158 = vadd.f32 %v1069, %v1157
        %1159 = vmatmul.bf16.gmra.mxu0 %v894
        %v1160 = vpop.f32.mrf.mxu0
        %v1161 = vadd.f32 %v1072, %v1160
        %v1162 = vpop.f32.mrf.mxu0
        %v1163 = vadd.f32 %v1074, %v1162
        %1164 = vmatmul.bf16.gmra.mxu0 %v896
        %v1165 = vpop.f32.mrf.mxu0
        %v1166 = vadd.f32 %v1077, %v1165
        %v1167 = vpop.f32.mrf.mxu0
        %v1168 = vadd.f32 %v1079, %v1167
        %1169 = vmatmul.bf16.gmra.mxu0 %v898
        %v1170 = vpop.f32.mrf.mxu0
        %v1171 = vadd.f32 %v1082, %v1170
        %v1172 = vpop.f32.mrf.mxu0
        %v1173 = vadd.f32 %v1084, %v1172
        %1174 = vmatmul.bf16.gmra.mxu0 %v900
        %v1175 = vpop.f32.mrf.mxu0
        %v1176 = vadd.f32 %v1087, %v1175
        %v1177 = vpop.f32.mrf.mxu0
        %v1178 = vadd.f32 %v1089, %v1177
        %1179 = vmatmul.bf16.gmra.mxu0 %v902
        %v1180 = vpop.f32.mrf.mxu0
        %v1181 = vadd.f32 %v1092, %v1180
        %v1182 = vpop.f32.mrf.mxu0
        %v1183 = vadd.f32 %v1094, %v1182
        %1184 = vmatmul.bf16.gmra.mxu0 %v904
        %v1185 = vpop.f32.mrf.mxu0
        %v1186 = vadd.f32 %v1097, %v1185
        %v1187 = vpop.f32.mrf.mxu0
        %v1188 = vadd.f32 %v1099, %v1187
        %1189 = vmatmul.bf16.gmra.mxu0 %v906
        %v1190 = vpop.f32.mrf.mxu0
        %v1191 = vadd.f32 %v1102, %v1190
        %v1192 = vpop.f32.mrf.mxu0
        %v1193 = vadd.f32 %v1104, %v1192
        %1194 = vmatmul.bf16.gmra.mxu0 %v908
        %v1195 = vpop.f32.mrf.mxu0
        %v1196 = vadd.f32 %v1107, %v1195
        %v1197 = vpop.f32.mrf.mxu0
        %v1198 = vadd.f32 %v1109, %v1197
        %1199 = vmatmul.bf16.gmra.mxu0 %v910
        %v1200 = vpop.f32.mrf.mxu0
        %v1201 = vadd.f32 %v1112, %v1200
        %v1202 = vpop.f32.mrf.mxu0
        %v1203 = vadd.f32 %v1114, %v1202
        %1204 = vmatmul.bf16.gmra.mxu0 %v912
        %v1205 = vpop.f32.mrf.mxu0
        %v1206 = vadd.f32 %v1117, %v1205
        %v1207 = vpop.f32.mrf.mxu0
        %v1208 = vadd.f32 %v1119, %v1207
        %1209 = vmatmul.bf16.gmra.mxu0 %v914
        %v1210 = vpop.f32.mrf.mxu0
        %v1211 = vadd.f32 %v1122, %v1210
        %v1212 = vpop.f32.mrf.mxu0
        %v1213 = vadd.f32 %v1124, %v1212
        %1214 = vmatmul.bf16.gmra.mxu0 %v916
        %v1215 = vpop.f32.mrf.mxu0
        %v1216 = vadd.f32 %v1127, %v1215
        %v1217 = vpop.f32.mrf.mxu0
        %v1218 = vadd.f32 %v1129, %v1217
        %1219 = vmatmul.bf16.gmra.mxu0 %v918
        %v1220 = vpop.f32.mrf.mxu0
        %v1221 = vadd.f32 %v1132, %v1220
        %v1222 = vpop.f32.mrf.mxu0
        %v1223 = vadd.f32 %v1134, %v1222
        %1224 = vdwg.mxu0
        %vm1225 = vcmp.gt.f32.partialorder %v1146, 0.0
        %vm1226 = vcmp.gt.f32.partialorder %v1148, 0.0
        %vm1227 = vcmp.gt.f32.partialorder %v1151, 0.0
        %vm1228 = vcmp.gt.f32.partialorder %v1153, 0.0
        %vm1229 = vcmp.gt.f32.partialorder %v1156, 0.0
        %vm1230 = vcmp.gt.f32.partialorder %v1158, 0.0
        %vm1231 = vcmp.gt.f32.partialorder %v1161, 0.0
        %vm1232 = vcmp.gt.f32.partialorder %v1163, 0.0
        %vm1233 = vcmp.gt.f32.partialorder %v1166, 0.0
        %vm1234 = vcmp.gt.f32.partialorder %v1168, 0.0
        %vm1235 = vcmp.gt.f32.partialorder %v1171, 0.0
        %vm1236 = vcmp.gt.f32.partialorder %v1173, 0.0
        %vm1237 = vcmp.gt.f32.partialorder %v1176, 0.0
        %vm1238 = vcmp.gt.f32.partialorder %v1178, 0.0
        %vm1239 = vcmp.gt.f32.partialorder %v1181, 0.0
        %vm1240 = vcmp.gt.f32.partialorder %v1183, 0.0
        %vm1241 = vcmp.gt.f32.partialorder %v1186, 0.0
        %vm1242 = vcmp.gt.f32.partialorder %v1188, 0.0
        %vm1243 = vcmp.gt.f32.partialorder %v1191, 0.0
        %vm1244 = vcmp.gt.f32.partialorder %v1193, 0.0
        %vm1245 = vcmp.gt.f32.partialorder %v1196, 0.0
        %vm1246 = vcmp.gt.f32.partialorder %v1198, 0.0
        %vm1247 = vcmp.gt.f32.partialorder %v1201, 0.0
        %vm1248 = vcmp.gt.f32.partialorder %v1203, 0.0
        %vm1249 = vcmp.gt.f32.partialorder %v1206, 0.0
        %vm1250 = vcmp.gt.f32.partialorder %v1208, 0.0
        %vm1251 = vcmp.gt.f32.partialorder %v1211, 0.0
        %vm1252 = vcmp.gt.f32.partialorder %v1213, 0.0
        %vm1253 = vcmp.gt.f32.partialorder %v1216, 0.0
        %vm1254 = vcmp.gt.f32.partialorder %v1218, 0.0
        %vm1255 = vcmp.gt.f32.partialorder %v1221, 0.0
        %vm1256 = vcmp.gt.f32.partialorder %v1223, 0.0
        %v1257 = vmul.f32 %v1146, 0.01
        %v1258 = vmul.f32 %v1148, 0.01
        %v1259 = vmul.f32 %v1151, 0.01
        %v1260 = vmul.f32 %v1153, 0.01
        %v1261 = vmul.f32 %v1156, 0.01
        %v1262 = vmul.f32 %v1158, 0.01
        %v1263 = vmul.f32 %v1161, 0.01
        %v1264 = vmul.f32 %v1163, 0.01
        %v1265 = vmul.f32 %v1166, 0.01
        %v1266 = vmul.f32 %v1168, 0.01
        %v1267 = vmul.f32 %v1171, 0.01
        %v1268 = vmul.f32 %v1173, 0.01
        %v1269 = vmul.f32 %v1176, 0.01
        %v1270 = vmul.f32 %v1178, 0.01
        %v1271 = vmul.f32 %v1181, 0.01
        %v1272 = vmul.f32 %v1183, 0.01
        %v1273 = vmul.f32 %v1186, 0.01
        %v1274 = vmul.f32 %v1188, 0.01
        %v1275 = vmul.f32 %v1191, 0.01
        %v1276 = vmul.f32 %v1193, 0.01
        %v1277 = vmul.f32 %v1196, 0.01
        %v1278 = vmul.f32 %v1198, 0.01
        %v1279 = vmul.f32 %v1201, 0.01
        %v1280 = vmul.f32 %v1203, 0.01
        %v1281 = vmul.f32 %v1206, 0.01
        %v1282 = vmul.f32 %v1208, 0.01
        %v1283 = vmul.f32 %v1211, 0.01
        %v1284 = vmul.f32 %v1213, 0.01
        %v1285 = vmul.f32 %v1216, 0.01
        %v1286 = vmul.f32 %v1218, 0.01
        %v1287 = vmul.f32 %v1221, 0.01
        %v1288 = vmul.f32 %v1223, 0.01
        %v1289 = vsel %vm1225, %v1146, %v1257
        %v1290 = vsel %vm1226, %v1148, %v1258
        %v1291 = vsel %vm1227, %v1151, %v1259
        %v1292 = vsel %vm1228, %v1153, %v1260
        %v1293 = vsel %vm1229, %v1156, %v1261
        %v1294 = vsel %vm1230, %v1158, %v1262
        %v1295 = vsel %vm1231, %v1161, %v1263
        %v1296 = vsel %vm1232, %v1163, %v1264
        %v1297 = vsel %vm1233, %v1166, %v1265
        %v1298 = vsel %vm1234, %v1168, %v1266
        %v1299 = vsel %vm1235, %v1171, %v1267
        %v1300 = vsel %vm1236, %v1173, %v1268
        %v1301 = vsel %vm1237, %v1176, %v1269
        %v1302 = vsel %vm1238, %v1178, %v1270
        %v1303 = vsel %vm1239, %v1181, %v1271
        %v1304 = vsel %vm1240, %v1183, %v1272
        %v1305 = vsel %vm1241, %v1186, %v1273
        %v1306 = vsel %vm1242, %v1188, %v1274
        %v1307 = vsel %vm1243, %v1191, %v1275
        %v1308 = vsel %vm1244, %v1193, %v1276
        %v1309 = vsel %vm1245, %v1196, %v1277
        %v1310 = vsel %vm1246, %v1198, %v1278
        %v1311 = vsel %vm1247, %v1201, %v1279
        %v1312 = vsel %vm1248, %v1203, %v1280
        %v1313 = vsel %vm1249, %v1206, %v1281
        %v1314 = vsel %vm1250, %v1208, %v1282
        %v1315 = vsel %vm1251, %v1211, %v1283
        %v1316 = vsel %vm1252, %v1213, %v1284
        %v1317 = vsel %vm1253, %v1216, %v1285
        %v1318 = vsel %vm1254, %v1218, %v1286
        %v1319 = vsel %vm1255, %v1221, %v1287
        %v1320 = vsel %vm1256, %v1223, %v1288
        %s1321 = smul.u32 %s28, 256
        %s1322 = scalar_lea.vmem [#allocation2], %s1321
        %1323 = vst [vmem:[%s1322] sm:$0xff] %v1289
        %1324 = vst [vmem:[%s1322 + $0x8] sm:$0xff] %v1290
        %1325 = vst [vmem:[%s1322 + $0x10] sm:$0xff] %v1291
        %1326 = vst [vmem:[%s1322 + $0x18] sm:$0xff] %v1292
        %1327 = vst [vmem:[%s1322 + $0x20] sm:$0xff] %v1293
        %1328 = vst [vmem:[%s1322 + $0x28] sm:$0xff] %v1294
        %1329 = vst [vmem:[%s1322 + $0x30] sm:$0xff] %v1295
        %1330 = vst [vmem:[%s1322 + $0x38] sm:$0xff] %v1296
        %1331 = vst [vmem:[%s1322 + $0x40] sm:$0xff] %v1297
        %1332 = vst [vmem:[%s1322 + $0x48] sm:$0xff] %v1298
        %1333 = vst [vmem:[%s1322 + $0x50] sm:$0xff] %v1299
        %1334 = vst [vmem:[%s1322 + $0x58] sm:$0xff] %v1300
        %1335 = vst [vmem:[%s1322 + $0x60] sm:$0xff] %v1301
        %1336 = vst [vmem:[%s1322 + $0x68] sm:$0xff] %v1302
        %1337 = vst [vmem:[%s1322 + $0x70] sm:$0xff] %v1303
        %1338 = vst [vmem:[%s1322 + $0x78] sm:$0xff] %v1304
        %1339 = vst [vmem:[%s1322 + $0x80] sm:$0xff] %v1305
        %1340 = vst [vmem:[%s1322 + $0x88] sm:$0xff] %v1306
        %1341 = vst [vmem:[%s1322 + $0x90] sm:$0xff] %v1307
        %1342 = vst [vmem:[%s1322 + $0x98] sm:$0xff] %v1308
        %1343 = vst [vmem:[%s1322 + $0xa0] sm:$0xff] %v1309
        %1344 = vst [vmem:[%s1322 + $0xa8] sm:$0xff] %v1310
        %1345 = vst [vmem:[%s1322 + $0xb0] sm:$0xff] %v1311
        %1346 = vst [vmem:[%s1322 + $0xb8] sm:$0xff] %v1312
        %1347 = vst [vmem:[%s1322 + $0xc0] sm:$0xff] %v1313
        %1348 = vst [vmem:[%s1322 + $0xc8] sm:$0xff] %v1314
        %1349 = vst [vmem:[%s1322 + $0xd0] sm:$0xff] %v1315
        %1350 = vst [vmem:[%s1322 + $0xd8] sm:$0xff] %v1316
        %1351 = vst [vmem:[%s1322 + $0xe0] sm:$0xff] %v1317
        %1352 = vst [vmem:[%s1322 + $0xe8] sm:$0xff] %v1318
        %1353 = vst [vmem:[%s1322 + $0xf0] sm:$0xff] %v1319
        %1354 = vst [vmem:[%s1322 + $0xf8] sm:$0xff] %v1320
        %p1355 = scmp.eq.s32.totalorder %s27, 2
        %p1356 = pnand %p1355, %p382
        %p1357 = pneg %p1356
        // Predicated region
        $region77: #{tpu_custom_call.1} parent=51 // pred_check
          _
        $region78: #{tpu_custom_call.1} parent=51 // pred_check_branch
          %1359 = sbr.rel (%p1356) target = $region80
        $region79: #{tpu_custom_call.1} parent=51 // pred_region
          %v1360 = vld [vmem:[#allocation2] sm:$0xff]
          %v1361 = vld [vmem:[#allocation2 + $0x8] sm:$0xff]
          %v1362 = vld [vmem:[#allocation2 + $0x10] sm:$0xff]
          %v1363 = vld [vmem:[#allocation2 + $0x18] sm:$0xff]
          %v1364 = vld [vmem:[#allocation2 + $0x20] sm:$0xff]
          %v1365 = vld [vmem:[#allocation2 + $0x28] sm:$0xff]
          %v1366 = vld [vmem:[#allocation2 + $0x30] sm:$0xff]
          %v1367 = vld [vmem:[#allocation2 + $0x38] sm:$0xff]
          %v1368 = vld [vmem:[#allocation2 + $0x40] sm:$0xff]
          %v1369 = vld [vmem:[#allocation2 + $0x48] sm:$0xff]
          %v1370 = vld [vmem:[#allocation2 + $0x50] sm:$0xff]
          %v1371 = vld [vmem:[#allocation2 + $0x58] sm:$0xff]
          %v1372 = vld [vmem:[#allocation2 + $0x60] sm:$0xff]
          %v1373 = vld [vmem:[#allocation2 + $0x68] sm:$0xff]
          %v1374 = vld [vmem:[#allocation2 + $0x70] sm:$0xff]
          %v1375 = vld [vmem:[#allocation2 + $0x78] sm:$0xff]
          %v1376 = vld [vmem:[#allocation2 + $0x80] sm:$0xff]
          %v1377 = vld [vmem:[#allocation2 + $0x88] sm:$0xff]
          %v1378 = vld [vmem:[#allocation2 + $0x90] sm:$0xff]
          %v1379 = vld [vmem:[#allocation2 + $0x98] sm:$0xff]
          %v1380 = vld [vmem:[#allocation2 + $0xa0] sm:$0xff]
          %v1381 = vld [vmem:[#allocation2 + $0xa8] sm:$0xff]
          %v1382 = vld [vmem:[#allocation2 + $0xb0] sm:$0xff]
          %v1383 = vld [vmem:[#allocation2 + $0xb8] sm:$0xff]
          %v1384 = vld [vmem:[#allocation2 + $0xc0] sm:$0xff]
          %v1385 = vld [vmem:[#allocation2 + $0xc8] sm:$0xff]
          %v1386 = vld [vmem:[#allocation2 + $0xd0] sm:$0xff]
          %v1387 = vld [vmem:[#allocation2 + $0xd8] sm:$0xff]
          %v1388 = vld [vmem:[#allocation2 + $0xe0] sm:$0xff]
          %v1389 = vld [vmem:[#allocation2 + $0xe8] sm:$0xff]
          %v1390 = vld [vmem:[#allocation2 + $0xf0] sm:$0xff]
          %v1391 = vld [vmem:[#allocation2 + $0xf8] sm:$0xff]
          %v1392 = vpack.c.bf16 %v1361, %v1360
          %v1393 = vpack.c.bf16 %v1363, %v1362
          %v1394 = vpack.c.bf16 %v1365, %v1364
          %v1395 = vpack.c.bf16 %v1367, %v1366
          %v1396 = vpack.c.bf16 %v1369, %v1368
          %v1397 = vpack.c.bf16 %v1371, %v1370
          %v1398 = vpack.c.bf16 %v1373, %v1372
          %v1399 = vpack.c.bf16 %v1375, %v1374
          %v1400 = vpack.c.bf16 %v1377, %v1376
          %v1401 = vpack.c.bf16 %v1379, %v1378
          %v1402 = vpack.c.bf16 %v1381, %v1380
          %v1403 = vpack.c.bf16 %v1383, %v1382
          %v1404 = vpack.c.bf16 %v1385, %v1384
          %v1405 = vpack.c.bf16 %v1387, %v1386
          %v1406 = vpack.c.bf16 %v1389, %v1388
          %v1407 = vpack.c.bf16 %v1391, %v1390
          %v1408 = vld [vmem:[%s4] sm:$0xff]
          %v1410 = vunpack.c.l.b16 %v1408
          %v1411 = vunpack.c.h.b16 %v1408
          %v1412 = vpack.c.b16 %v1410, %v1410
          %v1413 = vpack.c.b16 %v1411, %v1411
          %1416 = vmatpush.bf16.msra.mxu0 %v1399
          %1417 = vmatpush.bf16.msra.mxu0 %v1398
          %1418 = vmatpush.bf16.msra.mxu0 %v1397
          %1419 = vmatpush.bf16.msra.mxu0 %v1396
          %1420 = vmatpush.bf16.msra.mxu0 %v1395
          %1421 = vmatpush.bf16.msra.mxu0 %v1394
          %1422 = vmatpush.bf16.msra.mxu0 %v1393
          %1423 = vmatpush.bf16.msra.mxu0 %v1392
          %1424 = vmatmul.bf16.gmra.mxu0 %v1412
          %v1425 = vpop.f32.mrf.mxu0
          %v1426 = vadd.f32 0.0, %v1425
          %v1427 = vpop.f32.mrf.mxu0
          %1428 = vdwg.mxu0
          %1429 = vmatpush.bf16.msra.mxu0 %v1407
          %1430 = vmatpush.bf16.msra.mxu0 %v1406
          %1431 = vmatpush.bf16.msra.mxu0 %v1405
          %1432 = vmatpush.bf16.msra.mxu0 %v1404
          %1433 = vmatpush.bf16.msra.mxu0 %v1403
          %1434 = vmatpush.bf16.msra.mxu0 %v1402
          %1435 = vmatpush.bf16.msra.mxu0 %v1401
          %1436 = vmatpush.bf16.msra.mxu0 %v1400
          %1437 = vmatmul.bf16.gmra.mxu0 %v1413
          %v1438 = vpop.f32.mrf.mxu0
          %v1439 = vadd.f32 %v1426, %v1438
          %v1440 = vpop.f32.mrf.mxu0
          %1441 = vdwg.mxu0
          %v1442 = vld [vmem:[%s5] sm:$0xff]
          %1444 = vset.pattern.permute.xlu0 0
          %1445 = vperm.xlu0 %1444, %v1442
          %v1446 = vpop.permute.xlu0 %1445
          %v1448 = vmul.f32 %v1439, %v1446
          %v1449 = vld [vmem:[%s6] sm:$0x1]
          %v1451 = vperm.slane %v1449, 0
          %v1453 = vmul.f32 %v1448, %v1451
          %1454 = vadd.xlane.f32.xlu0 %v1453
          %v1455 = vpop.xlane.xlu0 %1454
          %v1456 = vld [vmem:[#allocation4] sm:$0x1]
          %v1458 = vperm.slane %v1456, 0
          %v1460 = vadd.f32 %v1455, %v1458
          %vm1461 = vcmask 7168
          %1462 = vst.msk [vmem:[%s8] sm:$0xff] %vm1461, %v1460
        $region80: #{tpu_custom_call.1} parent=51 // pred_fallthru
          _
        // Predicated region
        $region81: #{tpu_custom_call.1} parent=51 // pred_check
          %p1463 = pneg %p231
        $region82: #{tpu_custom_call.1} parent=51 // pred_check_branch
          %1465 = sbr.rel (%p1463) target = $region84
        $region83: #{tpu_custom_call.1} parent=51 // pred_region
          _
        $region84: #{tpu_custom_call.1} parent=51 // pred_fallthru
          _
        // Predicated region
        $region85: #{tpu_custom_call.1} parent=51 // pred_check
          %p1466 = pneg %p231
        $region86: #{tpu_custom_call.1} parent=51 // pred_check_branch
          %1468 = sbr.rel (%p1466) target = $region88
        $region87: #{tpu_custom_call.1} parent=51 // pred_region
          _
        $region88: #{tpu_custom_call.1} parent=51 // pred_fallthru
          _
      $region52: #{tpu_custom_call.1} parent=5 // pred_fallthru
        _
      %p1469 = scmp.le.s32.totalorder 2, %s18
      // Predicated region
      $region89: #{tpu_custom_call.1} parent=5 // pred_check
        %p1470 = pneg %p1469
      $region90: #{tpu_custom_call.1} parent=5 // pred_check_branch
        %1472 = sbr.rel (%p1470) target = $region92
      $region91: #{tpu_custom_call.1} parent=5 // pred_region
        %s1473 = ssub.s32 %s18, 2
      $region92: #{tpu_custom_call.1} parent=5 // pred_fallthru
        _
    $region6: #{tpu_custom_call.1} parent=1 // loop_footer
      %s22 = sadd.s32 1, %s18
    $region7: #{tpu_custom_call.1} parent=1 // loop_footer_branch
      %17 = sbr.rel target = $region3
    $region8: #{tpu_custom_call.1} parent=1 // loop_exit
      _
    %1474 = vsyncpa [#allocation6], 1
    %s1475 = scalar_lea.sflag [#allocation6], 1
    %1476 = vsyncpa %s1475, 1
    %1477 = vsyncpa [#allocation8], 1

</llo_original>
